<compile_context>
chip_gen: v7x
topology: tpu7x:2x2x1
jax: 0.10.0
libtpu: 0.0.40
codegen_flags: <defaults>
</compile_context>

<pallas_src>
import math

import numpy as np
import jax
import jax.numpy as jnp
from jax import lax
from jax.experimental import pallas as pl
from jax.experimental.pallas import tpu as pltpu


def _make_cbam_kernel(C, H, W, HW, HWp, k_c, k_s):
    p_c = (k_c - 1) // 2
    p_s = (k_s - 1) // 2
    pad_flat = p_s * W + p_s            # max |flat shift| of any 2-D conv tap
    kk = k_s * k_s

    def kernel(w1_ref, w2_ref, row_ref, col_ref, x_ref, o_ref):
        x = x_ref[...].astype(jnp.float32)                       # (nb, C, HWp)
        nb = x.shape[0]
        row = row_ref[...]                                       # (1, HWp) int32: flat -> h
        col = col_ref[...]                                       # (1, HWp) int32: flat -> w

        # ---------------- channel attention (Conv / ECA-style) ----------------
        if HWp != HW:                                            # mask padded lanes for max
            x_for_max = jnp.where(row < H, x, -jnp.inf)
        else:
            x_for_max = x
        avg_c = jnp.sum(x, axis=2, keepdims=True) * (1.0 / HW)   # AdaptiveAvgPool2d(1)
        max_c = jnp.max(x_for_max, axis=2, keepdims=True)        # AdaptiveMaxPool2d(1)
        pooled = avg_c + max_c        # conv has no bias -> conv(avg) + conv(max) = conv(avg+max)

        # 1-D conv over the channel axis: k_c shifted adds with SMEM scalar taps (VPU only).
        if p_c > 0:
            zc = jnp.zeros((nb, p_c, 1), jnp.float32)
            padded_c = jnp.concatenate([zc, pooled, zc], axis=1)  # (nb, C + 2*p_c, 1)
        else:
            padded_c = pooled
        conv_c = w1_ref[0] * padded_c[:, 0:C, :]
        for t in range(1, k_c):
            conv_c = conv_c + w1_ref[t] * padded_c[:, t:t + C, :]
        v_c = jax.nn.sigmoid(conv_c)                              # (nb, C, 1)

        x1 = x * v_c                                              # channel-refined features

        # ---------------- spatial attention ----------------
        # 2-D flat maps (nb, HWp): sublane = batch, lane = flattened spatial.
        max_s = jnp.max(x1, axis=1)                               # (nb, HWp)
        avg_s = jnp.sum(x1, axis=1) * (1.0 / C)                   # mean over channels

        # Flat zero padding handles every row-out-of-range tap (the read lands in the pad or
        # in the already-zero lane-padding region); only column wrap needs masking.
        zs = jnp.zeros((nb, pad_flat), jnp.float32)
        mp = jnp.concatenate([zs, max_s, zs], axis=1)             # (nb, HWp + 2*pad_flat)
        ap = jnp.concatenate([zs, avg_s, zs], axis=1)

        # Conv input channel 0 is the max map, channel 1 the avg map
        # (== torch.cat((max_x, avg_x), dim=1)).  Taps grouped by column offset so that a
        # single column-validity select per dw covers all k_s row offsets.
        conv_s = jnp.zeros((nb, HWp), jnp.float32)
        for dw in range(k_s):
            dwo = dw - p_s
            if dwo < 0:
                ok = col >= -dwo                                  # (1, HWp)
            elif dwo > 0:
                ok = col < (W - dwo)
            else:
                ok = None
            acc = None
            for dh in range(k_s):
                dho = dh - p_s
                off = pad_flat + dho * W + dwo                    # static, always >= 0
                tap = (w2_ref[dh * k_s + dw] * mp[:, off:off + HWp]
                       + w2_ref[kk + dh * k_s + dw] * ap[:, off:off + HWp])
                acc = tap if acc is None else acc + tap
            if ok is not None:
                acc = jnp.where(ok, acc, 0.0)                     # zero padding of the conv
            conv_s = conv_s + acc
        v_s = jax.nn.sigmoid(conv_s)                              # (nb, HWp)

        o_ref[...] = (x1 * v_s[:, None, :]).astype(o_ref.dtype)

    return kernel


def cbam_block_conv(x, conv1d_weight, conv2d_weight):
    """CBAMBlock forward (Conv channel attention + spatial attention).

    x:              (B, C, H, W) float32
    conv1d_weight:  Conv1d(1, 1, k_c, bias=False) weight, reshapeable to (k_c,)
    conv2d_weight:  Conv2d(2, 1, (k_s, k_s), bias=False) weight, shape (1, 2, k_s, k_s)
    """
    B, C, H, W = x.shape
    HW = H * W
    HWp = ((HW + 127) // 128) * 128          # lane-dense spatial axis (multiple of 128)
    w1 = jnp.asarray(conv1d_weight, jnp.float32).reshape(-1)      # (k_c,)
    k_c = int(w1.shape[0])
    k_s = int(conv2d_weight.shape[-1])
    w2 = jnp.asarray(conv2d_weight, jnp.float32).reshape(-1)      # (2*k_s*k_s,)  [max | avg]

    x2 = x.reshape(B, C, HW)
    if HWp != HW:
        x2 = jnp.pad(x2, ((0, 0), (0, 0), (0, HWp - HW)))

    lane = np.arange(HWp, dtype=np.int32)
    row_map = jnp.asarray((lane // W).reshape(1, HWp))
    col_map = jnp.asarray((lane % W).reshape(1, HWp))

    # Pick the batch-block size: big enough to amortize the ~0.35us/step overhead, small
    # enough that double-buffered in/out blocks plus in-kernel f32 temporaries fit VMEM,
    # and keep >= 2 grid steps so both TensorCores get work (megacore) when B >= 2.
    itemsize = x.dtype.itemsize
    per_batch = C * HWp * itemsize
    budget = 32 * 2**20
    nb = max(1, min(B, budget // (8 * per_batch)))
    if B >= 2:
        nb = max(1, min(nb, B // 2))
    while B % nb:
        nb -= 1

    grid = (B // nb,)
    kernel = _make_cbam_kernel(C, H, W, HW, HWp, k_c, k_s)

    cost = pl.CostEstimate(
        flops=int(8 * B * C * HW + 4 * B * HW * k_s * k_s),
        transcendentals=int(B * (C + HW)),
        bytes_accessed=int(2 * B * C * HW * itemsize),
    )
    vmem_limit = int(min(64 * 2**20, max(32 * 2**20, 9 * nb * per_batch)))

    out = pl.pallas_call(
        kernel,
        out_shape=jax.ShapeDtypeStruct((B, C, HWp), x.dtype),
        grid_spec=pltpu.PrefetchScalarGridSpec(
            num_scalar_prefetch=0,
            grid=grid,
            in_specs=[
                pl.BlockSpec(memory_space=pltpu.MemorySpace.SMEM),   # conv1d taps (k_c,)
                pl.BlockSpec(memory_space=pltpu.MemorySpace.SMEM),   # conv2d taps (2*k_s*k_s,)
                pl.BlockSpec((1, HWp), lambda i: (0, 0)),            # flat -> row map
                pl.BlockSpec((1, HWp), lambda i: (0, 0)),            # flat -> col map
                pl.BlockSpec((nb, C, HWp), lambda i: (i, 0, 0)),     # x
            ],
            out_specs=pl.BlockSpec((nb, C, HWp), lambda i: (i, 0, 0)),
        ),
        compiler_params=pltpu.CompilerParams(
            dimension_semantics=("parallel",),
            vmem_limit_bytes=vmem_limit,
        ),
        cost_estimate=cost,
    )(w1, w2, row_map, col_map, x2)

    if HWp != HW:
        out = out[:, :, :HW]
    return out.reshape(B, C, H, W)


def _reference(x, conv1d_weight, conv2d_weight):
    """Pure-JAX reference mirroring the PyTorch CBAMBlock forward (Conv mode)."""
    B, C, H, W = x.shape
    w1 = jnp.asarray(conv1d_weight, jnp.float32).reshape(-1)
    k_c = int(w1.shape[0])
    p_c = (k_c - 1) // 2
    k_s = int(conv2d_weight.shape[-1])
    p_s = (k_s - 1) // 2

    # --- channel attention (Conv / ECA style) ---
    avg = jnp.mean(x, axis=(2, 3))                   # (B, C)
    mx = jnp.max(x, axis=(2, 3))                     # (B, C)

    def conv1d(s):                                   # s: (B, C)
        sp = jnp.pad(s, ((0, 0), (p_c, p_c)))
        out = jnp.zeros_like(s)
        for t in range(k_c):
            out = out + w1[t] * sp[:, t:t + C]
        return out

    v_c = jax.nn.sigmoid(conv1d(avg) + conv1d(mx))
    x1 = x * v_c[:, :, None, None]

    # --- spatial attention ---
    max_s = jnp.max(x1, axis=1, keepdims=True)
    avg_s = jnp.mean(x1, axis=1, keepdims=True)
    inp = jnp.concatenate([max_s, avg_s], axis=1)    # torch.cat((max_x, avg_x), dim=1)
    v_s = lax.conv_general_dilated(
        inp, jnp.asarray(conv2d_weight, jnp.float32),
        window_strides=(1, 1), padding=((p_s, p_s), (p_s, p_s)),
        dimension_numbers=("NCHW", "OIHW", "NCHW"),
        precision=lax.Precision.HIGHEST)
    v_s = jax.nn.sigmoid(v_s)
    return x1 * v_s


if __name__ == "__main__":
    B, C, H, W = 2, 16, 16, 16
    gamma, b = 2, 1
    k_c = int(abs((math.log(C, 2) + b) / gamma))
    k_c = k_c if k_c % 2 else k_c + 1                # -> 3 for C=16
    k_s = 7                                          # CBAM spatial-attention kernel size

    key = jax.random.PRNGKey(0)
    kx, kw1, kw2 = jax.random.split(key, 3)
    x = jax.random.normal(kx, (B, C, H, W), dtype=jnp.float32)
    # Deterministic synthetic weights: Conv1d(1,1,k_c,bias=False), Conv2d(2,1,k_s,bias=False).
    conv1d_weight = jax.random.normal(kw1, (k_c,), dtype=jnp.float32) * 0.5
    conv2d_weight = jax.random.normal(kw2, (1, 2, k_s, k_s), dtype=jnp.float32) * 0.2

    fwd = jax.jit(cbam_block_conv)
    out = fwd(x, conv1d_weight, conv2d_weight)
    out = jax.block_until_ready(out)

    ref = _reference(x, conv1d_weight, conv2d_weight)
    assert out.shape == (B, C, H, W)
    assert jnp.allclose(out, ref, atol=1e-4, rtol=1e-4), "mismatch vs reference"

    print("KERNEL_OK")
</pallas_src>

<mosaic_0001>
module attributes {stable_mosaic.version = 11 : i64} {
  func.func @kernel(%arg0: i32, %arg1: memref<3xf32, #tpu.memory_space<smem>>, %arg2: memref<98xf32, #tpu.memory_space<smem>>, %arg3: memref<1x256xi32, #tpu.memory_space<vmem>>, %arg4: memref<1x256xi32, #tpu.memory_space<vmem>>, %arg5: memref<1x16x256xf32, #tpu.memory_space<vmem>>, %arg6: memref<1x16x256xf32, #tpu.memory_space<vmem>>) attributes {dimension_semantics = [#tpu.dimension_semantics<parallel>], iteration_bounds = array<i64: 2>, scalar_prefetch = 0 : i64, scratch_operands = 0 : i64, tpu.core_type = #tpu.core_type<tc>, window_params = [{transform_indices = @transform_0, window_bounds = array<i64: 3>}, {transform_indices = @transform_1, window_bounds = array<i64: 98>}, {pipeline_mode = #tpu.pipeline_mode<synchronous>, transform_indices = @transform_2, window_bounds = array<i64: 1, 256>}, {pipeline_mode = #tpu.pipeline_mode<synchronous>, transform_indices = @transform_3, window_bounds = array<i64: 1, 256>}, {transform_indices = @transform_4, window_bounds = array<i64: 1, 16, 256>}, {transform_indices = @transform_5, window_bounds = array<i64: 1, 16, 256>}]} {
    %c0 = arith.constant 0 : index
    %c0_0 = arith.constant 0 : index
    %c0_1 = arith.constant 0 : index
    %0 = vector.load %arg5[%c0, %c0_0, %c0_1] : memref<1x16x256xf32, #tpu.memory_space<vmem>>, vector<1x16x256xf32>
    %c0_2 = arith.constant 0 : index
    %c0_3 = arith.constant 0 : index
    %1 = vector.load %arg4[%c0_2, %c0_3] : memref<1x256xi32, #tpu.memory_space<vmem>>, vector<1x256xi32>
    %cst = arith.constant dense<0.000000e+00> : vector<1x16xf32>
    %2 = vector.multi_reduction <add>, %0, %cst [2] : vector<1x16x256xf32> to vector<1x16xf32>
    %3 = vector.shape_cast %2 : vector<1x16xf32> to vector<1x16x1xf32>
    %cst_4 = arith.constant 3.906250e-03 : f32
    %4 = vector.broadcast %cst_4 : f32 to vector<1x16x1xf32>
    %5 = arith.mulf %3, %4 : vector<1x16x1xf32>
    %cst_5 = arith.constant dense<0xFF800000> : vector<1x16xf32>
    %6 = vector.multi_reduction <maximumf>, %0, %cst_5 [2] : vector<1x16x256xf32> to vector<1x16xf32>
    %7 = vector.shape_cast %6 : vector<1x16xf32> to vector<1x16x1xf32>
    %8 = arith.addf %5, %7 : vector<1x16x1xf32>
    %cst_6 = arith.constant 0.000000e+00 : f32
    %9 = vector.broadcast %cst_6 : f32 to vector<1x1x1xf32>
    %10 = tpu.concatenate %9, %8, %9 in 1 : vector<1x1x1xf32>, vector<1x16x1xf32>, vector<1x1x1xf32> -> vector<1x18x1xf32>
    %c0_7 = arith.constant 0 : index
    %11 = memref.load %arg1[%c0_7] : memref<3xf32, #tpu.memory_space<smem>>
    %12 = vector.extract_strided_slice %10 {offsets = [0, 0, 0], sizes = [1, 16, 1], strides = [1, 1, 1]} : vector<1x18x1xf32> to vector<1x16x1xf32>
    %13 = vector.broadcast %11 : f32 to vector<1x16x1xf32>
    %14 = arith.mulf %13, %12 : vector<1x16x1xf32>
    %c1 = arith.constant 1 : index
    %15 = memref.load %arg1[%c1] : memref<3xf32, #tpu.memory_space<smem>>
    %16 = vector.extract_strided_slice %10 {offsets = [0, 1, 0], sizes = [1, 16, 1], strides = [1, 1, 1]} : vector<1x18x1xf32> to vector<1x16x1xf32>
    %17 = vector.broadcast %15 : f32 to vector<1x16x1xf32>
    %18 = arith.mulf %17, %16 : vector<1x16x1xf32>
    %19 = arith.addf %14, %18 : vector<1x16x1xf32>
    %c2 = arith.constant 2 : index
    %20 = memref.load %arg1[%c2] : memref<3xf32, #tpu.memory_space<smem>>
    %21 = vector.extract_strided_slice %10 {offsets = [0, 2, 0], sizes = [1, 16, 1], strides = [1, 1, 1]} : vector<1x18x1xf32> to vector<1x16x1xf32>
    %22 = vector.broadcast %20 : f32 to vector<1x16x1xf32>
    %23 = arith.mulf %22, %21 : vector<1x16x1xf32>
    %24 = arith.addf %19, %23 : vector<1x16x1xf32>
    %25 = arith.negf %24 : vector<1x16x1xf32>
    %26 = math.exp %25 : vector<1x16x1xf32>
    %cst_8 = arith.constant 1.000000e+00 : f32
    %27 = vector.broadcast %cst_8 : f32 to vector<1x16x1xf32>
    %28 = arith.addf %27, %26 : vector<1x16x1xf32>
    %29 = arith.divf %27, %28 : vector<1x16x1xf32>
    %30 = vector.broadcast %29 : vector<1x16x1xf32> to vector<1x16x256xf32>
    %31 = arith.mulf %0, %30 : vector<1x16x256xf32>
    %cst_9 = arith.constant dense<0xFF800000> : vector<1x256xf32>
    %32 = vector.multi_reduction <maximumf>, %31, %cst_9 [1] : vector<1x16x256xf32> to vector<1x256xf32>
    %cst_10 = arith.constant dense<0.000000e+00> : vector<1x256xf32>
    %33 = vector.multi_reduction <add>, %31, %cst_10 [1] : vector<1x16x256xf32> to vector<1x256xf32>
    %cst_11 = arith.constant 6.250000e-02 : f32
    %34 = vector.broadcast %cst_11 : f32 to vector<1x256xf32>
    %35 = arith.mulf %33, %34 : vector<1x256xf32>
    %cst_12 = arith.constant 0.000000e+00 : f32
    %36 = vector.broadcast %cst_12 : f32 to vector<1x51xf32>
    %37 = tpu.concatenate %36, %32, %36 in 1 : vector<1x51xf32>, vector<1x256xf32>, vector<1x51xf32> -> vector<1x358xf32>
    %38 = tpu.concatenate %36, %35, %36 in 1 : vector<1x51xf32>, vector<1x256xf32>, vector<1x51xf32> -> vector<1x358xf32>
    %cst_13 = arith.constant 0.000000e+00 : f32
    %39 = vector.broadcast %cst_13 : f32 to vector<1x256xf32>
    %c3_i32 = arith.constant 3 : i32
    %40 = vector.broadcast %c3_i32 : i32 to vector<1x256xi32>
    %41 = arith.cmpi sge, %1, %40 : vector<1x256xi32>
    %c0_14 = arith.constant 0 : index
    %42 = memref.load %arg2[%c0_14] : memref<98xf32, #tpu.memory_space<smem>>
    %43 = vector.extract_strided_slice %37 {offsets = [0, 0], sizes = [1, 256], strides = [1, 1]} : vector<1x358xf32> to vector<1x256xf32>
    %44 = vector.broadcast %42 : f32 to vector<1x256xf32>
    %45 = arith.mulf %44, %43 : vector<1x256xf32>
    %c49 = arith.constant 49 : index
    %46 = memref.load %arg2[%c49] : memref<98xf32, #tpu.memory_space<smem>>
    %47 = vector.extract_strided_slice %38 {offsets = [0, 0], sizes = [1, 256], strides = [1, 1]} : vector<1x358xf32> to vector<1x256xf32>
    %48 = vector.broadcast %46 : f32 to vector<1x256xf32>
    %49 = arith.mulf %48, %47 : vector<1x256xf32>
    %50 = arith.addf %45, %49 : vector<1x256xf32>
    %c7 = arith.constant 7 : index
    %51 = memref.load %arg2[%c7] : memref<98xf32, #tpu.memory_space<smem>>
    %52 = vector.extract_strided_slice %37 {offsets = [0, 16], sizes = [1, 256], strides = [1, 1]} : vector<1x358xf32> to vector<1x256xf32>
    %53 = vector.broadcast %51 : f32 to vector<1x256xf32>
    %54 = arith.mulf %53, %52 : vector<1x256xf32>
    %c56 = arith.constant 56 : index
    %55 = memref.load %arg2[%c56] : memref<98xf32, #tpu.memory_space<smem>>
    %56 = vector.extract_strided_slice %38 {offsets = [0, 16], sizes = [1, 256], strides = [1, 1]} : vector<1x358xf32> to vector<1x256xf32>
    %57 = vector.broadcast %55 : f32 to vector<1x256xf32>
    %58 = arith.mulf %57, %56 : vector<1x256xf32>
    %59 = arith.addf %54, %58 : vector<1x256xf32>
    %60 = arith.addf %50, %59 : vector<1x256xf32>
    %c14 = arith.constant 14 : index
    %61 = memref.load %arg2[%c14] : memref<98xf32, #tpu.memory_space<smem>>
    %62 = vector.extract_strided_slice %37 {offsets = [0, 32], sizes = [1, 256], strides = [1, 1]} : vector<1x358xf32> to vector<1x256xf32>
    %63 = vector.broadcast %61 : f32 to vector<1x256xf32>
    %64 = arith.mulf %63, %62 : vector<1x256xf32>
    %c63 = arith.constant 63 : index
    %65 = memref.load %arg2[%c63] : memref<98xf32, #tpu.memory_space<smem>>
    %66 = vector.extract_strided_slice %38 {offsets = [0, 32], sizes = [1, 256], strides = [1, 1]} : vector<1x358xf32> to vector<1x256xf32>
    %67 = vector.broadcast %65 : f32 to vector<1x256xf32>
    %68 = arith.mulf %67, %66 : vector<1x256xf32>
    %69 = arith.addf %64, %68 : vector<1x256xf32>
    %70 = arith.addf %60, %69 : vector<1x256xf32>
    %c21 = arith.constant 21 : index
    %71 = memref.load %arg2[%c21] : memref<98xf32, #tpu.memory_space<smem>>
    %72 = vector.extract_strided_slice %37 {offsets = [0, 48], sizes = [1, 256], strides = [1, 1]} : vector<1x358xf32> to vector<1x256xf32>
    %73 = vector.broadcast %71 : f32 to vector<1x256xf32>
    %74 = arith.mulf %73, %72 : vector<1x256xf32>
    %c70 = arith.constant 70 : index
    %75 = memref.load %arg2[%c70] : memref<98xf32, #tpu.memory_space<smem>>
    %76 = vector.extract_strided_slice %38 {offsets = [0, 48], sizes = [1, 256], strides = [1, 1]} : vector<1x358xf32> to vector<1x256xf32>
    %77 = vector.broadcast %75 : f32 to vector<1x256xf32>
    %78 = arith.mulf %77, %76 : vector<1x256xf32>
    %79 = arith.addf %74, %78 : vector<1x256xf32>
    %80 = arith.addf %70, %79 : vector<1x256xf32>
    %c28 = arith.constant 28 : index
    %81 = memref.load %arg2[%c28] : memref<98xf32, #tpu.memory_space<smem>>
    %82 = vector.extract_strided_slice %37 {offsets = [0, 64], sizes = [1, 256], strides = [1, 1]} : vector<1x358xf32> to vector<1x256xf32>
    %83 = vector.broadcast %81 : f32 to vector<1x256xf32>
    %84 = arith.mulf %83, %82 : vector<1x256xf32>
    %c77 = arith.constant 77 : index
    %85 = memref.load %arg2[%c77] : memref<98xf32, #tpu.memory_space<smem>>
    %86 = vector.extract_strided_slice %38 {offsets = [0, 64], sizes = [1, 256], strides = [1, 1]} : vector<1x358xf32> to vector<1x256xf32>
    %87 = vector.broadcast %85 : f32 to vector<1x256xf32>
    %88 = arith.mulf %87, %86 : vector<1x256xf32>
    %89 = arith.addf %84, %88 : vector<1x256xf32>
    %90 = arith.addf %80, %89 : vector<1x256xf32>
    %c35 = arith.constant 35 : index
    %91 = memref.load %arg2[%c35] : memref<98xf32, #tpu.memory_space<smem>>
    %92 = vector.extract_strided_slice %37 {offsets = [0, 80], sizes = [1, 256], strides = [1, 1]} : vector<1x358xf32> to vector<1x256xf32>
    %93 = vector.broadcast %91 : f32 to vector<1x256xf32>
    %94 = arith.mulf %93, %92 : vector<1x256xf32>
    %c84 = arith.constant 84 : index
    %95 = memref.load %arg2[%c84] : memref<98xf32, #tpu.memory_space<smem>>
    %96 = vector.extract_strided_slice %38 {offsets = [0, 80], sizes = [1, 256], strides = [1, 1]} : vector<1x358xf32> to vector<1x256xf32>
    %97 = vector.broadcast %95 : f32 to vector<1x256xf32>
    %98 = arith.mulf %97, %96 : vector<1x256xf32>
    %99 = arith.addf %94, %98 : vector<1x256xf32>
    %100 = arith.addf %90, %99 : vector<1x256xf32>
    %c42 = arith.constant 42 : index
    %101 = memref.load %arg2[%c42] : memref<98xf32, #tpu.memory_space<smem>>
    %102 = vector.extract_strided_slice %37 {offsets = [0, 96], sizes = [1, 256], strides = [1, 1]} : vector<1x358xf32> to vector<1x256xf32>
    %103 = vector.broadcast %101 : f32 to vector<1x256xf32>
    %104 = arith.mulf %103, %102 : vector<1x256xf32>
    %c91 = arith.constant 91 : index
    %105 = memref.load %arg2[%c91] : memref<98xf32, #tpu.memory_space<smem>>
    %106 = vector.extract_strided_slice %38 {offsets = [0, 96], sizes = [1, 256], strides = [1, 1]} : vector<1x358xf32> to vector<1x256xf32>
    %107 = vector.broadcast %105 : f32 to vector<1x256xf32>
    %108 = arith.mulf %107, %106 : vector<1x256xf32>
    %109 = arith.addf %104, %108 : vector<1x256xf32>
    %110 = arith.addf %100, %109 : vector<1x256xf32>
    %cst_15 = arith.constant 0.000000e+00 : f32
    %111 = vector.broadcast %cst_15 : f32 to vector<1x256xf32>
    %112 = arith.select %41, %110, %111 : vector<1x256xi1>, vector<1x256xf32>
    %113 = arith.addf %39, %112 : vector<1x256xf32>
    %c2_i32 = arith.constant 2 : i32
    %114 = vector.broadcast %c2_i32 : i32 to vector<1x256xi32>
    %115 = arith.cmpi sge, %1, %114 : vector<1x256xi32>
    %c1_16 = arith.constant 1 : index
    %116 = memref.load %arg2[%c1_16] : memref<98xf32, #tpu.memory_space<smem>>
    %117 = vector.extract_strided_slice %37 {offsets = [0, 1], sizes = [1, 256], strides = [1, 1]} : vector<1x358xf32> to vector<1x256xf32>
    %118 = vector.broadcast %116 : f32 to vector<1x256xf32>
    %119 = arith.mulf %118, %117 : vector<1x256xf32>
    %c50 = arith.constant 50 : index
    %120 = memref.load %arg2[%c50] : memref<98xf32, #tpu.memory_space<smem>>
    %121 = vector.extract_strided_slice %38 {offsets = [0, 1], sizes = [1, 256], strides = [1, 1]} : vector<1x358xf32> to vector<1x256xf32>
    %122 = vector.broadcast %120 : f32 to vector<1x256xf32>
    %123 = arith.mulf %122, %121 : vector<1x256xf32>
    %124 = arith.addf %119, %123 : vector<1x256xf32>
    %c8 = arith.constant 8 : index
    %125 = memref.load %arg2[%c8] : memref<98xf32, #tpu.memory_space<smem>>
    %126 = vector.extract_strided_slice %37 {offsets = [0, 17], sizes = [1, 256], strides = [1, 1]} : vector<1x358xf32> to vector<1x256xf32>
    %127 = vector.broadcast %125 : f32 to vector<1x256xf32>
    %128 = arith.mulf %127, %126 : vector<1x256xf32>
    %c57 = arith.constant 57 : index
    %129 = memref.load %arg2[%c57] : memref<98xf32, #tpu.memory_space<smem>>
    %130 = vector.extract_strided_slice %38 {offsets = [0, 17], sizes = [1, 256], strides = [1, 1]} : vector<1x358xf32> to vector<1x256xf32>
    %131 = vector.broadcast %129 : f32 to vector<1x256xf32>
    %132 = arith.mulf %131, %130 : vector<1x256xf32>
    %133 = arith.addf %128, %132 : vector<1x256xf32>
    %134 = arith.addf %124, %133 : vector<1x256xf32>
    %c15 = arith.constant 15 : index
    %135 = memref.load %arg2[%c15] : memref<98xf32, #tpu.memory_space<smem>>
    %136 = vector.extract_strided_slice %37 {offsets = [0, 33], sizes = [1, 256], strides = [1, 1]} : vector<1x358xf32> to vector<1x256xf32>
    %137 = vector.broadcast %135 : f32 to vector<1x256xf32>
    %138 = arith.mulf %137, %136 : vector<1x256xf32>
    %c64 = arith.constant 64 : index
    %139 = memref.load %arg2[%c64] : memref<98xf32, #tpu.memory_space<smem>>
    %140 = vector.extract_strided_slice %38 {offsets = [0, 33], sizes = [1, 256], strides = [1, 1]} : vector<1x358xf32> to vector<1x256xf32>
    %141 = vector.broadcast %139 : f32 to vector<1x256xf32>
    %142 = arith.mulf %141, %140 : vector<1x256xf32>
    %143 = arith.addf %138, %142 : vector<1x256xf32>
    %144 = arith.addf %134, %143 : vector<1x256xf32>
    %c22 = arith.constant 22 : index
    %145 = memref.load %arg2[%c22] : memref<98xf32, #tpu.memory_space<smem>>
    %146 = vector.extract_strided_slice %37 {offsets = [0, 49], sizes = [1, 256], strides = [1, 1]} : vector<1x358xf32> to vector<1x256xf32>
    %147 = vector.broadcast %145 : f32 to vector<1x256xf32>
    %148 = arith.mulf %147, %146 : vector<1x256xf32>
    %c71 = arith.constant 71 : index
    %149 = memref.load %arg2[%c71] : memref<98xf32, #tpu.memory_space<smem>>
    %150 = vector.extract_strided_slice %38 {offsets = [0, 49], sizes = [1, 256], strides = [1, 1]} : vector<1x358xf32> to vector<1x256xf32>
    %151 = vector.broadcast %149 : f32 to vector<1x256xf32>
    %152 = arith.mulf %151, %150 : vector<1x256xf32>
    %153 = arith.addf %148, %152 : vector<1x256xf32>
    %154 = arith.addf %144, %153 : vector<1x256xf32>
    %c29 = arith.constant 29 : index
    %155 = memref.load %arg2[%c29] : memref<98xf32, #tpu.memory_space<smem>>
    %156 = vector.extract_strided_slice %37 {offsets = [0, 65], sizes = [1, 256], strides = [1, 1]} : vector<1x358xf32> to vector<1x256xf32>
    %157 = vector.broadcast %155 : f32 to vector<1x256xf32>
    %158 = arith.mulf %157, %156 : vector<1x256xf32>
    %c78 = arith.constant 78 : index
    %159 = memref.load %arg2[%c78] : memref<98xf32, #tpu.memory_space<smem>>
    %160 = vector.extract_strided_slice %38 {offsets = [0, 65], sizes = [1, 256], strides = [1, 1]} : vector<1x358xf32> to vector<1x256xf32>
    %161 = vector.broadcast %159 : f32 to vector<1x256xf32>
    %162 = arith.mulf %161, %160 : vector<1x256xf32>
    %163 = arith.addf %158, %162 : vector<1x256xf32>
    %164 = arith.addf %154, %163 : vector<1x256xf32>
    %c36 = arith.constant 36 : index
    %165 = memref.load %arg2[%c36] : memref<98xf32, #tpu.memory_space<smem>>
    %166 = vector.extract_strided_slice %37 {offsets = [0, 81], sizes = [1, 256], strides = [1, 1]} : vector<1x358xf32> to vector<1x256xf32>
    %167 = vector.broadcast %165 : f32 to vector<1x256xf32>
    %168 = arith.mulf %167, %166 : vector<1x256xf32>
    %c85 = arith.constant 85 : index
    %169 = memref.load %arg2[%c85] : memref<98xf32, #tpu.memory_space<smem>>
    %170 = vector.extract_strided_slice %38 {offsets = [0, 81], sizes = [1, 256], strides = [1, 1]} : vector<1x358xf32> to vector<1x256xf32>
    %171 = vector.broadcast %169 : f32 to vector<1x256xf32>
    %172 = arith.mulf %171, %170 : vector<1x256xf32>
    %173 = arith.addf %168, %172 : vector<1x256xf32>
    %174 = arith.addf %164, %173 : vector<1x256xf32>
    %c43 = arith.constant 43 : index
    %175 = memref.load %arg2[%c43] : memref<98xf32, #tpu.memory_space<smem>>
    %176 = vector.extract_strided_slice %37 {offsets = [0, 97], sizes = [1, 256], strides = [1, 1]} : vector<1x358xf32> to vector<1x256xf32>
    %177 = vector.broadcast %175 : f32 to vector<1x256xf32>
    %178 = arith.mulf %177, %176 : vector<1x256xf32>
    %c92 = arith.constant 92 : index
    %179 = memref.load %arg2[%c92] : memref<98xf32, #tpu.memory_space<smem>>
    %180 = vector.extract_strided_slice %38 {offsets = [0, 97], sizes = [1, 256], strides = [1, 1]} : vector<1x358xf32> to vector<1x256xf32>
    %181 = vector.broadcast %179 : f32 to vector<1x256xf32>
    %182 = arith.mulf %181, %180 : vector<1x256xf32>
    %183 = arith.addf %178, %182 : vector<1x256xf32>
    %184 = arith.addf %174, %183 : vector<1x256xf32>
    %cst_17 = arith.constant 0.000000e+00 : f32
    %185 = vector.broadcast %cst_17 : f32 to vector<1x256xf32>
    %186 = arith.select %115, %184, %185 : vector<1x256xi1>, vector<1x256xf32>
    %187 = arith.addf %113, %186 : vector<1x256xf32>
    %c1_i32 = arith.constant 1 : i32
    %188 = vector.broadcast %c1_i32 : i32 to vector<1x256xi32>
    %189 = arith.cmpi sge, %1, %188 : vector<1x256xi32>
    %c2_18 = arith.constant 2 : index
    %190 = memref.load %arg2[%c2_18] : memref<98xf32, #tpu.memory_space<smem>>
    %191 = vector.extract_strided_slice %37 {offsets = [0, 2], sizes = [1, 256], strides = [1, 1]} : vector<1x358xf32> to vector<1x256xf32>
    %192 = vector.broadcast %190 : f32 to vector<1x256xf32>
    %193 = arith.mulf %192, %191 : vector<1x256xf32>
    %c51 = arith.constant 51 : index
    %194 = memref.load %arg2[%c51] : memref<98xf32, #tpu.memory_space<smem>>
    %195 = vector.extract_strided_slice %38 {offsets = [0, 2], sizes = [1, 256], strides = [1, 1]} : vector<1x358xf32> to vector<1x256xf32>
    %196 = vector.broadcast %194 : f32 to vector<1x256xf32>
    %197 = arith.mulf %196, %195 : vector<1x256xf32>
    %198 = arith.addf %193, %197 : vector<1x256xf32>
    %c9 = arith.constant 9 : index
    %199 = memref.load %arg2[%c9] : memref<98xf32, #tpu.memory_space<smem>>
    %200 = vector.extract_strided_slice %37 {offsets = [0, 18], sizes = [1, 256], strides = [1, 1]} : vector<1x358xf32> to vector<1x256xf32>
    %201 = vector.broadcast %199 : f32 to vector<1x256xf32>
    %202 = arith.mulf %201, %200 : vector<1x256xf32>
    %c58 = arith.constant 58 : index
    %203 = memref.load %arg2[%c58] : memref<98xf32, #tpu.memory_space<smem>>
    %204 = vector.extract_strided_slice %38 {offsets = [0, 18], sizes = [1, 256], strides = [1, 1]} : vector<1x358xf32> to vector<1x256xf32>
    %205 = vector.broadcast %203 : f32 to vector<1x256xf32>
    %206 = arith.mulf %205, %204 : vector<1x256xf32>
    %207 = arith.addf %202, %206 : vector<1x256xf32>
    %208 = arith.addf %198, %207 : vector<1x256xf32>
    %c16 = arith.constant 16 : index
    %209 = memref.load %arg2[%c16] : memref<98xf32, #tpu.memory_space<smem>>
    %210 = vector.extract_strided_slice %37 {offsets = [0, 34], sizes = [1, 256], strides = [1, 1]} : vector<1x358xf32> to vector<1x256xf32>
    %211 = vector.broadcast %209 : f32 to vector<1x256xf32>
    %212 = arith.mulf %211, %210 : vector<1x256xf32>
    %c65 = arith.constant 65 : index
    %213 = memref.load %arg2[%c65] : memref<98xf32, #tpu.memory_space<smem>>
    %214 = vector.extract_strided_slice %38 {offsets = [0, 34], sizes = [1, 256], strides = [1, 1]} : vector<1x358xf32> to vector<1x256xf32>
    %215 = vector.broadcast %213 : f32 to vector<1x256xf32>
    %216 = arith.mulf %215, %214 : vector<1x256xf32>
    %217 = arith.addf %212, %216 : vector<1x256xf32>
    %218 = arith.addf %208, %217 : vector<1x256xf32>
    %c23 = arith.constant 23 : index
    %219 = memref.load %arg2[%c23] : memref<98xf32, #tpu.memory_space<smem>>
    %220 = vector.extract_strided_slice %37 {offsets = [0, 50], sizes = [1, 256], strides = [1, 1]} : vector<1x358xf32> to vector<1x256xf32>
    %221 = vector.broadcast %219 : f32 to vector<1x256xf32>
    %222 = arith.mulf %221, %220 : vector<1x256xf32>
    %c72 = arith.constant 72 : index
    %223 = memref.load %arg2[%c72] : memref<98xf32, #tpu.memory_space<smem>>
    %224 = vector.extract_strided_slice %38 {offsets = [0, 50], sizes = [1, 256], strides = [1, 1]} : vector<1x358xf32> to vector<1x256xf32>
    %225 = vector.broadcast %223 : f32 to vector<1x256xf32>
    %226 = arith.mulf %225, %224 : vector<1x256xf32>
    %227 = arith.addf %222, %226 : vector<1x256xf32>
    %228 = arith.addf %218, %227 : vector<1x256xf32>
    %c30 = arith.constant 30 : index
    %229 = memref.load %arg2[%c30] : memref<98xf32, #tpu.memory_space<smem>>
    %230 = vector.extract_strided_slice %37 {offsets = [0, 66], sizes = [1, 256], strides = [1, 1]} : vector<1x358xf32> to vector<1x256xf32>
    %231 = vector.broadcast %229 : f32 to vector<1x256xf32>
    %232 = arith.mulf %231, %230 : vector<1x256xf32>
    %c79 = arith.constant 79 : index
    %233 = memref.load %arg2[%c79] : memref<98xf32, #tpu.memory_space<smem>>
    %234 = vector.extract_strided_slice %38 {offsets = [0, 66], sizes = [1, 256], strides = [1, 1]} : vector<1x358xf32> to vector<1x256xf32>
    %235 = vector.broadcast %233 : f32 to vector<1x256xf32>
    %236 = arith.mulf %235, %234 : vector<1x256xf32>
    %237 = arith.addf %232, %236 : vector<1x256xf32>
    %238 = arith.addf %228, %237 : vector<1x256xf32>
    %c37 = arith.constant 37 : index
    %239 = memref.load %arg2[%c37] : memref<98xf32, #tpu.memory_space<smem>>
    %240 = vector.extract_strided_slice %37 {offsets = [0, 82], sizes = [1, 256], strides = [1, 1]} : vector<1x358xf32> to vector<1x256xf32>
    %241 = vector.broadcast %239 : f32 to vector<1x256xf32>
    %242 = arith.mulf %241, %240 : vector<1x256xf32>
    %c86 = arith.constant 86 : index
    %243 = memref.load %arg2[%c86] : memref<98xf32, #tpu.memory_space<smem>>
    %244 = vector.extract_strided_slice %38 {offsets = [0, 82], sizes = [1, 256], strides = [1, 1]} : vector<1x358xf32> to vector<1x256xf32>
    %245 = vector.broadcast %243 : f32 to vector<1x256xf32>
    %246 = arith.mulf %245, %244 : vector<1x256xf32>
    %247 = arith.addf %242, %246 : vector<1x256xf32>
    %248 = arith.addf %238, %247 : vector<1x256xf32>
    %c44 = arith.constant 44 : index
    %249 = memref.load %arg2[%c44] : memref<98xf32, #tpu.memory_space<smem>>
    %250 = vector.extract_strided_slice %37 {offsets = [0, 98], sizes = [1, 256], strides = [1, 1]} : vector<1x358xf32> to vector<1x256xf32>
    %251 = vector.broadcast %249 : f32 to vector<1x256xf32>
    %252 = arith.mulf %251, %250 : vector<1x256xf32>
    %c93 = arith.constant 93 : index
    %253 = memref.load %arg2[%c93] : memref<98xf32, #tpu.memory_space<smem>>
    %254 = vector.extract_strided_slice %38 {offsets = [0, 98], sizes = [1, 256], strides = [1, 1]} : vector<1x358xf32> to vector<1x256xf32>
    %255 = vector.broadcast %253 : f32 to vector<1x256xf32>
    %256 = arith.mulf %255, %254 : vector<1x256xf32>
    %257 = arith.addf %252, %256 : vector<1x256xf32>
    %258 = arith.addf %248, %257 : vector<1x256xf32>
    %cst_19 = arith.constant 0.000000e+00 : f32
    %259 = vector.broadcast %cst_19 : f32 to vector<1x256xf32>
    %260 = arith.select %189, %258, %259 : vector<1x256xi1>, vector<1x256xf32>
    %261 = arith.addf %187, %260 : vector<1x256xf32>
    %c3 = arith.constant 3 : index
    %262 = memref.load %arg2[%c3] : memref<98xf32, #tpu.memory_space<smem>>
    %263 = vector.extract_strided_slice %37 {offsets = [0, 3], sizes = [1, 256], strides = [1, 1]} : vector<1x358xf32> to vector<1x256xf32>
    %264 = vector.broadcast %262 : f32 to vector<1x256xf32>
    %265 = arith.mulf %264, %263 : vector<1x256xf32>
    %c52 = arith.constant 52 : index
    %266 = memref.load %arg2[%c52] : memref<98xf32, #tpu.memory_space<smem>>
    %267 = vector.extract_strided_slice %38 {offsets = [0, 3], sizes = [1, 256], strides = [1, 1]} : vector<1x358xf32> to vector<1x256xf32>
    %268 = vector.broadcast %266 : f32 to vector<1x256xf32>
    %269 = arith.mulf %268, %267 : vector<1x256xf32>
    %270 = arith.addf %265, %269 : vector<1x256xf32>
    %c10 = arith.constant 10 : index
    %271 = memref.load %arg2[%c10] : memref<98xf32, #tpu.memory_space<smem>>
    %272 = vector.extract_strided_slice %37 {offsets = [0, 19], sizes = [1, 256], strides = [1, 1]} : vector<1x358xf32> to vector<1x256xf32>
    %273 = vector.broadcast %271 : f32 to vector<1x256xf32>
    %274 = arith.mulf %273, %272 : vector<1x256xf32>
    %c59 = arith.constant 59 : index
    %275 = memref.load %arg2[%c59] : memref<98xf32, #tpu.memory_space<smem>>
    %276 = vector.extract_strided_slice %38 {offsets = [0, 19], sizes = [1, 256], strides = [1, 1]} : vector<1x358xf32> to vector<1x256xf32>
    %277 = vector.broadcast %275 : f32 to vector<1x256xf32>
    %278 = arith.mulf %277, %276 : vector<1x256xf32>
    %279 = arith.addf %274, %278 : vector<1x256xf32>
    %280 = arith.addf %270, %279 : vector<1x256xf32>
    %c17 = arith.constant 17 : index
    %281 = memref.load %arg2[%c17] : memref<98xf32, #tpu.memory_space<smem>>
    %282 = vector.extract_strided_slice %37 {offsets = [0, 35], sizes = [1, 256], strides = [1, 1]} : vector<1x358xf32> to vector<1x256xf32>
    %283 = vector.broadcast %281 : f32 to vector<1x256xf32>
    %284 = arith.mulf %283, %282 : vector<1x256xf32>
    %c66 = arith.constant 66 : index
    %285 = memref.load %arg2[%c66] : memref<98xf32, #tpu.memory_space<smem>>
    %286 = vector.extract_strided_slice %38 {offsets = [0, 35], sizes = [1, 256], strides = [1, 1]} : vector<1x358xf32> to vector<1x256xf32>
    %287 = vector.broadcast %285 : f32 to vector<1x256xf32>
    %288 = arith.mulf %287, %286 : vector<1x256xf32>
    %289 = arith.addf %284, %288 : vector<1x256xf32>
    %290 = arith.addf %280, %289 : vector<1x256xf32>
    %c24 = arith.constant 24 : index
    %291 = memref.load %arg2[%c24] : memref<98xf32, #tpu.memory_space<smem>>
    %292 = vector.extract_strided_slice %37 {offsets = [0, 51], sizes = [1, 256], strides = [1, 1]} : vector<1x358xf32> to vector<1x256xf32>
    %293 = vector.broadcast %291 : f32 to vector<1x256xf32>
    %294 = arith.mulf %293, %292 : vector<1x256xf32>
    %c73 = arith.constant 73 : index
    %295 = memref.load %arg2[%c73] : memref<98xf32, #tpu.memory_space<smem>>
    %296 = vector.extract_strided_slice %38 {offsets = [0, 51], sizes = [1, 256], strides = [1, 1]} : vector<1x358xf32> to vector<1x256xf32>
    %297 = vector.broadcast %295 : f32 to vector<1x256xf32>
    %298 = arith.mulf %297, %296 : vector<1x256xf32>
    %299 = arith.addf %294, %298 : vector<1x256xf32>
    %300 = arith.addf %290, %299 : vector<1x256xf32>
    %c31 = arith.constant 31 : index
    %301 = memref.load %arg2[%c31] : memref<98xf32, #tpu.memory_space<smem>>
    %302 = vector.extract_strided_slice %37 {offsets = [0, 67], sizes = [1, 256], strides = [1, 1]} : vector<1x358xf32> to vector<1x256xf32>
    %303 = vector.broadcast %301 : f32 to vector<1x256xf32>
    %304 = arith.mulf %303, %302 : vector<1x256xf32>
    %c80 = arith.constant 80 : index
    %305 = memref.load %arg2[%c80] : memref<98xf32, #tpu.memory_space<smem>>
    %306 = vector.extract_strided_slice %38 {offsets = [0, 67], sizes = [1, 256], strides = [1, 1]} : vector<1x358xf32> to vector<1x256xf32>
    %307 = vector.broadcast %305 : f32 to vector<1x256xf32>
    %308 = arith.mulf %307, %306 : vector<1x256xf32>
    %309 = arith.addf %304, %308 : vector<1x256xf32>
    %310 = arith.addf %300, %309 : vector<1x256xf32>
    %c38 = arith.constant 38 : index
    %311 = memref.load %arg2[%c38] : memref<98xf32, #tpu.memory_space<smem>>
    %312 = vector.extract_strided_slice %37 {offsets = [0, 83], sizes = [1, 256], strides = [1, 1]} : vector<1x358xf32> to vector<1x256xf32>
    %313 = vector.broadcast %311 : f32 to vector<1x256xf32>
    %314 = arith.mulf %313, %312 : vector<1x256xf32>
    %c87 = arith.constant 87 : index
    %315 = memref.load %arg2[%c87] : memref<98xf32, #tpu.memory_space<smem>>
    %316 = vector.extract_strided_slice %38 {offsets = [0, 83], sizes = [1, 256], strides = [1, 1]} : vector<1x358xf32> to vector<1x256xf32>
    %317 = vector.broadcast %315 : f32 to vector<1x256xf32>
    %318 = arith.mulf %317, %316 : vector<1x256xf32>
    %319 = arith.addf %314, %318 : vector<1x256xf32>
    %320 = arith.addf %310, %319 : vector<1x256xf32>
    %c45 = arith.constant 45 : index
    %321 = memref.load %arg2[%c45] : memref<98xf32, #tpu.memory_space<smem>>
    %322 = vector.extract_strided_slice %37 {offsets = [0, 99], sizes = [1, 256], strides = [1, 1]} : vector<1x358xf32> to vector<1x256xf32>
    %323 = vector.broadcast %321 : f32 to vector<1x256xf32>
    %324 = arith.mulf %323, %322 : vector<1x256xf32>
    %c94 = arith.constant 94 : index
    %325 = memref.load %arg2[%c94] : memref<98xf32, #tpu.memory_space<smem>>
    %326 = vector.extract_strided_slice %38 {offsets = [0, 99], sizes = [1, 256], strides = [1, 1]} : vector<1x358xf32> to vector<1x256xf32>
    %327 = vector.broadcast %325 : f32 to vector<1x256xf32>
    %328 = arith.mulf %327, %326 : vector<1x256xf32>
    %329 = arith.addf %324, %328 : vector<1x256xf32>
    %330 = arith.addf %320, %329 : vector<1x256xf32>
    %331 = arith.addf %261, %330 : vector<1x256xf32>
    %c15_i32 = arith.constant 15 : i32
    %332 = vector.broadcast %c15_i32 : i32 to vector<1x256xi32>
    %333 = arith.cmpi slt, %1, %332 : vector<1x256xi32>
    %c4 = arith.constant 4 : index
    %334 = memref.load %arg2[%c4] : memref<98xf32, #tpu.memory_space<smem>>
    %335 = vector.extract_strided_slice %37 {offsets = [0, 4], sizes = [1, 256], strides = [1, 1]} : vector<1x358xf32> to vector<1x256xf32>
    %336 = vector.broadcast %334 : f32 to vector<1x256xf32>
    %337 = arith.mulf %336, %335 : vector<1x256xf32>
    %c53 = arith.constant 53 : index
    %338 = memref.load %arg2[%c53] : memref<98xf32, #tpu.memory_space<smem>>
    %339 = vector.extract_strided_slice %38 {offsets = [0, 4], sizes = [1, 256], strides = [1, 1]} : vector<1x358xf32> to vector<1x256xf32>
    %340 = vector.broadcast %338 : f32 to vector<1x256xf32>
    %341 = arith.mulf %340, %339 : vector<1x256xf32>
    %342 = arith.addf %337, %341 : vector<1x256xf32>
    %c11 = arith.constant 11 : index
    %343 = memref.load %arg2[%c11] : memref<98xf32, #tpu.memory_space<smem>>
    %344 = vector.extract_strided_slice %37 {offsets = [0, 20], sizes = [1, 256], strides = [1, 1]} : vector<1x358xf32> to vector<1x256xf32>
    %345 = vector.broadcast %343 : f32 to vector<1x256xf32>
    %346 = arith.mulf %345, %344 : vector<1x256xf32>
    %c60 = arith.constant 60 : index
    %347 = memref.load %arg2[%c60] : memref<98xf32, #tpu.memory_space<smem>>
    %348 = vector.extract_strided_slice %38 {offsets = [0, 20], sizes = [1, 256], strides = [1, 1]} : vector<1x358xf32> to vector<1x256xf32>
    %349 = vector.broadcast %347 : f32 to vector<1x256xf32>
    %350 = arith.mulf %349, %348 : vector<1x256xf32>
    %351 = arith.addf %346, %350 : vector<1x256xf32>
    %352 = arith.addf %342, %351 : vector<1x256xf32>
    %c18 = arith.constant 18 : index
    %353 = memref.load %arg2[%c18] : memref<98xf32, #tpu.memory_space<smem>>
    %354 = vector.extract_strided_slice %37 {offsets = [0, 36], sizes = [1, 256], strides = [1, 1]} : vector<1x358xf32> to vector<1x256xf32>
    %355 = vector.broadcast %353 : f32 to vector<1x256xf32>
    %356 = arith.mulf %355, %354 : vector<1x256xf32>
    %c67 = arith.constant 67 : index
    %357 = memref.load %arg2[%c67] : memref<98xf32, #tpu.memory_space<smem>>
    %358 = vector.extract_strided_slice %38 {offsets = [0, 36], sizes = [1, 256], strides = [1, 1]} : vector<1x358xf32> to vector<1x256xf32>
    %359 = vector.broadcast %357 : f32 to vector<1x256xf32>
    %360 = arith.mulf %359, %358 : vector<1x256xf32>
    %361 = arith.addf %356, %360 : vector<1x256xf32>
    %362 = arith.addf %352, %361 : vector<1x256xf32>
    %c25 = arith.constant 25 : index
    %363 = memref.load %arg2[%c25] : memref<98xf32, #tpu.memory_space<smem>>
    %364 = vector.extract_strided_slice %37 {offsets = [0, 52], sizes = [1, 256], strides = [1, 1]} : vector<1x358xf32> to vector<1x256xf32>
    %365 = vector.broadcast %363 : f32 to vector<1x256xf32>
    %366 = arith.mulf %365, %364 : vector<1x256xf32>
    %c74 = arith.constant 74 : index
    %367 = memref.load %arg2[%c74] : memref<98xf32, #tpu.memory_space<smem>>
    %368 = vector.extract_strided_slice %38 {offsets = [0, 52], sizes = [1, 256], strides = [1, 1]} : vector<1x358xf32> to vector<1x256xf32>
    %369 = vector.broadcast %367 : f32 to vector<1x256xf32>
    %370 = arith.mulf %369, %368 : vector<1x256xf32>
    %371 = arith.addf %366, %370 : vector<1x256xf32>
    %372 = arith.addf %362, %371 : vector<1x256xf32>
    %c32 = arith.constant 32 : index
    %373 = memref.load %arg2[%c32] : memref<98xf32, #tpu.memory_space<smem>>
    %374 = vector.extract_strided_slice %37 {offsets = [0, 68], sizes = [1, 256], strides = [1, 1]} : vector<1x358xf32> to vector<1x256xf32>
    %375 = vector.broadcast %373 : f32 to vector<1x256xf32>
    %376 = arith.mulf %375, %374 : vector<1x256xf32>
    %c81 = arith.constant 81 : index
    %377 = memref.load %arg2[%c81] : memref<98xf32, #tpu.memory_space<smem>>
    %378 = vector.extract_strided_slice %38 {offsets = [0, 68], sizes = [1, 256], strides = [1, 1]} : vector<1x358xf32> to vector<1x256xf32>
    %379 = vector.broadcast %377 : f32 to vector<1x256xf32>
    %380 = arith.mulf %379, %378 : vector<1x256xf32>
    %381 = arith.addf %376, %380 : vector<1x256xf32>
    %382 = arith.addf %372, %381 : vector<1x256xf32>
    %c39 = arith.constant 39 : index
    %383 = memref.load %arg2[%c39] : memref<98xf32, #tpu.memory_space<smem>>
    %384 = vector.extract_strided_slice %37 {offsets = [0, 84], sizes = [1, 256], strides = [1, 1]} : vector<1x358xf32> to vector<1x256xf32>
    %385 = vector.broadcast %383 : f32 to vector<1x256xf32>
    %386 = arith.mulf %385, %384 : vector<1x256xf32>
    %c88 = arith.constant 88 : index
    %387 = memref.load %arg2[%c88] : memref<98xf32, #tpu.memory_space<smem>>
    %388 = vector.extract_strided_slice %38 {offsets = [0, 84], sizes = [1, 256], strides = [1, 1]} : vector<1x358xf32> to vector<1x256xf32>
    %389 = vector.broadcast %387 : f32 to vector<1x256xf32>
    %390 = arith.mulf %389, %388 : vector<1x256xf32>
    %391 = arith.addf %386, %390 : vector<1x256xf32>
    %392 = arith.addf %382, %391 : vector<1x256xf32>
    %c46 = arith.constant 46 : index
    %393 = memref.load %arg2[%c46] : memref<98xf32, #tpu.memory_space<smem>>
    %394 = vector.extract_strided_slice %37 {offsets = [0, 100], sizes = [1, 256], strides = [1, 1]} : vector<1x358xf32> to vector<1x256xf32>
    %395 = vector.broadcast %393 : f32 to vector<1x256xf32>
    %396 = arith.mulf %395, %394 : vector<1x256xf32>
    %c95 = arith.constant 95 : index
    %397 = memref.load %arg2[%c95] : memref<98xf32, #tpu.memory_space<smem>>
    %398 = vector.extract_strided_slice %38 {offsets = [0, 100], sizes = [1, 256], strides = [1, 1]} : vector<1x358xf32> to vector<1x256xf32>
    %399 = vector.broadcast %397 : f32 to vector<1x256xf32>
    %400 = arith.mulf %399, %398 : vector<1x256xf32>
    %401 = arith.addf %396, %400 : vector<1x256xf32>
    %402 = arith.addf %392, %401 : vector<1x256xf32>
    %cst_20 = arith.constant 0.000000e+00 : f32
    %403 = vector.broadcast %cst_20 : f32 to vector<1x256xf32>
    %404 = arith.select %333, %402, %403 : vector<1x256xi1>, vector<1x256xf32>
    %405 = arith.addf %331, %404 : vector<1x256xf32>
    %c14_i32 = arith.constant 14 : i32
    %406 = vector.broadcast %c14_i32 : i32 to vector<1x256xi32>
    %407 = arith.cmpi slt, %1, %406 : vector<1x256xi32>
    %c5 = arith.constant 5 : index
    %408 = memref.load %arg2[%c5] : memref<98xf32, #tpu.memory_space<smem>>
    %409 = vector.extract_strided_slice %37 {offsets = [0, 5], sizes = [1, 256], strides = [1, 1]} : vector<1x358xf32> to vector<1x256xf32>
    %410 = vector.broadcast %408 : f32 to vector<1x256xf32>
    %411 = arith.mulf %410, %409 : vector<1x256xf32>
    %c54 = arith.constant 54 : index
    %412 = memref.load %arg2[%c54] : memref<98xf32, #tpu.memory_space<smem>>
    %413 = vector.extract_strided_slice %38 {offsets = [0, 5], sizes = [1, 256], strides = [1, 1]} : vector<1x358xf32> to vector<1x256xf32>
    %414 = vector.broadcast %412 : f32 to vector<1x256xf32>
    %415 = arith.mulf %414, %413 : vector<1x256xf32>
    %416 = arith.addf %411, %415 : vector<1x256xf32>
    %c12 = arith.constant 12 : index
    %417 = memref.load %arg2[%c12] : memref<98xf32, #tpu.memory_space<smem>>
    %418 = vector.extract_strided_slice %37 {offsets = [0, 21], sizes = [1, 256], strides = [1, 1]} : vector<1x358xf32> to vector<1x256xf32>
    %419 = vector.broadcast %417 : f32 to vector<1x256xf32>
    %420 = arith.mulf %419, %418 : vector<1x256xf32>
    %c61 = arith.constant 61 : index
    %421 = memref.load %arg2[%c61] : memref<98xf32, #tpu.memory_space<smem>>
    %422 = vector.extract_strided_slice %38 {offsets = [0, 21], sizes = [1, 256], strides = [1, 1]} : vector<1x358xf32> to vector<1x256xf32>
    %423 = vector.broadcast %421 : f32 to vector<1x256xf32>
    %424 = arith.mulf %423, %422 : vector<1x256xf32>
    %425 = arith.addf %420, %424 : vector<1x256xf32>
    %426 = arith.addf %416, %425 : vector<1x256xf32>
    %c19 = arith.constant 19 : index
    %427 = memref.load %arg2[%c19] : memref<98xf32, #tpu.memory_space<smem>>
    %428 = vector.extract_strided_slice %37 {offsets = [0, 37], sizes = [1, 256], strides = [1, 1]} : vector<1x358xf32> to vector<1x256xf32>
    %429 = vector.broadcast %427 : f32 to vector<1x256xf32>
    %430 = arith.mulf %429, %428 : vector<1x256xf32>
    %c68 = arith.constant 68 : index
    %431 = memref.load %arg2[%c68] : memref<98xf32, #tpu.memory_space<smem>>
    %432 = vector.extract_strided_slice %38 {offsets = [0, 37], sizes = [1, 256], strides = [1, 1]} : vector<1x358xf32> to vector<1x256xf32>
    %433 = vector.broadcast %431 : f32 to vector<1x256xf32>
    %434 = arith.mulf %433, %432 : vector<1x256xf32>
    %435 = arith.addf %430, %434 : vector<1x256xf32>
    %436 = arith.addf %426, %435 : vector<1x256xf32>
    %c26 = arith.constant 26 : index
    %437 = memref.load %arg2[%c26] : memref<98xf32, #tpu.memory_space<smem>>
    %438 = vector.extract_strided_slice %37 {offsets = [0, 53], sizes = [1, 256], strides = [1, 1]} : vector<1x358xf32> to vector<1x256xf32>
    %439 = vector.broadcast %437 : f32 to vector<1x256xf32>
    %440 = arith.mulf %439, %438 : vector<1x256xf32>
    %c75 = arith.constant 75 : index
    %441 = memref.load %arg2[%c75] : memref<98xf32, #tpu.memory_space<smem>>
    %442 = vector.extract_strided_slice %38 {offsets = [0, 53], sizes = [1, 256], strides = [1, 1]} : vector<1x358xf32> to vector<1x256xf32>
    %443 = vector.broadcast %441 : f32 to vector<1x256xf32>
    %444 = arith.mulf %443, %442 : vector<1x256xf32>
    %445 = arith.addf %440, %444 : vector<1x256xf32>
    %446 = arith.addf %436, %445 : vector<1x256xf32>
    %c33 = arith.constant 33 : index
    %447 = memref.load %arg2[%c33] : memref<98xf32, #tpu.memory_space<smem>>
    %448 = vector.extract_strided_slice %37 {offsets = [0, 69], sizes = [1, 256], strides = [1, 1]} : vector<1x358xf32> to vector<1x256xf32>
    %449 = vector.broadcast %447 : f32 to vector<1x256xf32>
    %450 = arith.mulf %449, %448 : vector<1x256xf32>
    %c82 = arith.constant 82 : index
    %451 = memref.load %arg2[%c82] : memref<98xf32, #tpu.memory_space<smem>>
    %452 = vector.extract_strided_slice %38 {offsets = [0, 69], sizes = [1, 256], strides = [1, 1]} : vector<1x358xf32> to vector<1x256xf32>
    %453 = vector.broadcast %451 : f32 to vector<1x256xf32>
    %454 = arith.mulf %453, %452 : vector<1x256xf32>
    %455 = arith.addf %450, %454 : vector<1x256xf32>
    %456 = arith.addf %446, %455 : vector<1x256xf32>
    %c40 = arith.constant 40 : index
    %457 = memref.load %arg2[%c40] : memref<98xf32, #tpu.memory_space<smem>>
    %458 = vector.extract_strided_slice %37 {offsets = [0, 85], sizes = [1, 256], strides = [1, 1]} : vector<1x358xf32> to vector<1x256xf32>
    %459 = vector.broadcast %457 : f32 to vector<1x256xf32>
    %460 = arith.mulf %459, %458 : vector<1x256xf32>
    %c89 = arith.constant 89 : index
    %461 = memref.load %arg2[%c89] : memref<98xf32, #tpu.memory_space<smem>>
    %462 = vector.extract_strided_slice %38 {offsets = [0, 85], sizes = [1, 256], strides = [1, 1]} : vector<1x358xf32> to vector<1x256xf32>
    %463 = vector.broadcast %461 : f32 to vector<1x256xf32>
    %464 = arith.mulf %463, %462 : vector<1x256xf32>
    %465 = arith.addf %460, %464 : vector<1x256xf32>
    %466 = arith.addf %456, %465 : vector<1x256xf32>
    %c47 = arith.constant 47 : index
    %467 = memref.load %arg2[%c47] : memref<98xf32, #tpu.memory_space<smem>>
    %468 = vector.extract_strided_slice %37 {offsets = [0, 101], sizes = [1, 256], strides = [1, 1]} : vector<1x358xf32> to vector<1x256xf32>
    %469 = vector.broadcast %467 : f32 to vector<1x256xf32>
    %470 = arith.mulf %469, %468 : vector<1x256xf32>
    %c96 = arith.constant 96 : index
    %471 = memref.load %arg2[%c96] : memref<98xf32, #tpu.memory_space<smem>>
    %472 = vector.extract_strided_slice %38 {offsets = [0, 101], sizes = [1, 256], strides = [1, 1]} : vector<1x358xf32> to vector<1x256xf32>
    %473 = vector.broadcast %471 : f32 to vector<1x256xf32>
    %474 = arith.mulf %473, %472 : vector<1x256xf32>
    %475 = arith.addf %470, %474 : vector<1x256xf32>
    %476 = arith.addf %466, %475 : vector<1x256xf32>
    %cst_21 = arith.constant 0.000000e+00 : f32
    %477 = vector.broadcast %cst_21 : f32 to vector<1x256xf32>
    %478 = arith.select %407, %476, %477 : vector<1x256xi1>, vector<1x256xf32>
    %479 = arith.addf %405, %478 : vector<1x256xf32>
    %c13_i32 = arith.constant 13 : i32
    %480 = vector.broadcast %c13_i32 : i32 to vector<1x256xi32>
    %481 = arith.cmpi slt, %1, %480 : vector<1x256xi32>
    %c6 = arith.constant 6 : index
    %482 = memref.load %arg2[%c6] : memref<98xf32, #tpu.memory_space<smem>>
    %483 = vector.extract_strided_slice %37 {offsets = [0, 6], sizes = [1, 256], strides = [1, 1]} : vector<1x358xf32> to vector<1x256xf32>
    %484 = vector.broadcast %482 : f32 to vector<1x256xf32>
    %485 = arith.mulf %484, %483 : vector<1x256xf32>
    %c55 = arith.constant 55 : index
    %486 = memref.load %arg2[%c55] : memref<98xf32, #tpu.memory_space<smem>>
    %487 = vector.extract_strided_slice %38 {offsets = [0, 6], sizes = [1, 256], strides = [1, 1]} : vector<1x358xf32> to vector<1x256xf32>
    %488 = vector.broadcast %486 : f32 to vector<1x256xf32>
    %489 = arith.mulf %488, %487 : vector<1x256xf32>
    %490 = arith.addf %485, %489 : vector<1x256xf32>
    %c13 = arith.constant 13 : index
    %491 = memref.load %arg2[%c13] : memref<98xf32, #tpu.memory_space<smem>>
    %492 = vector.extract_strided_slice %37 {offsets = [0, 22], sizes = [1, 256], strides = [1, 1]} : vector<1x358xf32> to vector<1x256xf32>
    %493 = vector.broadcast %491 : f32 to vector<1x256xf32>
    %494 = arith.mulf %493, %492 : vector<1x256xf32>
    %c62 = arith.constant 62 : index
    %495 = memref.load %arg2[%c62] : memref<98xf32, #tpu.memory_space<smem>>
    %496 = vector.extract_strided_slice %38 {offsets = [0, 22], sizes = [1, 256], strides = [1, 1]} : vector<1x358xf32> to vector<1x256xf32>
    %497 = vector.broadcast %495 : f32 to vector<1x256xf32>
    %498 = arith.mulf %497, %496 : vector<1x256xf32>
    %499 = arith.addf %494, %498 : vector<1x256xf32>
    %500 = arith.addf %490, %499 : vector<1x256xf32>
    %c20 = arith.constant 20 : index
    %501 = memref.load %arg2[%c20] : memref<98xf32, #tpu.memory_space<smem>>
    %502 = vector.extract_strided_slice %37 {offsets = [0, 38], sizes = [1, 256], strides = [1, 1]} : vector<1x358xf32> to vector<1x256xf32>
    %503 = vector.broadcast %501 : f32 to vector<1x256xf32>
    %504 = arith.mulf %503, %502 : vector<1x256xf32>
    %c69 = arith.constant 69 : index
    %505 = memref.load %arg2[%c69] : memref<98xf32, #tpu.memory_space<smem>>
    %506 = vector.extract_strided_slice %38 {offsets = [0, 38], sizes = [1, 256], strides = [1, 1]} : vector<1x358xf32> to vector<1x256xf32>
    %507 = vector.broadcast %505 : f32 to vector<1x256xf32>
    %508 = arith.mulf %507, %506 : vector<1x256xf32>
    %509 = arith.addf %504, %508 : vector<1x256xf32>
    %510 = arith.addf %500, %509 : vector<1x256xf32>
    %c27 = arith.constant 27 : index
    %511 = memref.load %arg2[%c27] : memref<98xf32, #tpu.memory_space<smem>>
    %512 = vector.extract_strided_slice %37 {offsets = [0, 54], sizes = [1, 256], strides = [1, 1]} : vector<1x358xf32> to vector<1x256xf32>
    %513 = vector.broadcast %511 : f32 to vector<1x256xf32>
    %514 = arith.mulf %513, %512 : vector<1x256xf32>
    %c76 = arith.constant 76 : index
    %515 = memref.load %arg2[%c76] : memref<98xf32, #tpu.memory_space<smem>>
    %516 = vector.extract_strided_slice %38 {offsets = [0, 54], sizes = [1, 256], strides = [1, 1]} : vector<1x358xf32> to vector<1x256xf32>
    %517 = vector.broadcast %515 : f32 to vector<1x256xf32>
    %518 = arith.mulf %517, %516 : vector<1x256xf32>
    %519 = arith.addf %514, %518 : vector<1x256xf32>
    %520 = arith.addf %510, %519 : vector<1x256xf32>
    %c34 = arith.constant 34 : index
    %521 = memref.load %arg2[%c34] : memref<98xf32, #tpu.memory_space<smem>>
    %522 = vector.extract_strided_slice %37 {offsets = [0, 70], sizes = [1, 256], strides = [1, 1]} : vector<1x358xf32> to vector<1x256xf32>
    %523 = vector.broadcast %521 : f32 to vector<1x256xf32>
    %524 = arith.mulf %523, %522 : vector<1x256xf32>
    %c83 = arith.constant 83 : index
    %525 = memref.load %arg2[%c83] : memref<98xf32, #tpu.memory_space<smem>>
    %526 = vector.extract_strided_slice %38 {offsets = [0, 70], sizes = [1, 256], strides = [1, 1]} : vector<1x358xf32> to vector<1x256xf32>
    %527 = vector.broadcast %525 : f32 to vector<1x256xf32>
    %528 = arith.mulf %527, %526 : vector<1x256xf32>
    %529 = arith.addf %524, %528 : vector<1x256xf32>
    %530 = arith.addf %520, %529 : vector<1x256xf32>
    %c41 = arith.constant 41 : index
    %531 = memref.load %arg2[%c41] : memref<98xf32, #tpu.memory_space<smem>>
    %532 = vector.extract_strided_slice %37 {offsets = [0, 86], sizes = [1, 256], strides = [1, 1]} : vector<1x358xf32> to vector<1x256xf32>
    %533 = vector.broadcast %531 : f32 to vector<1x256xf32>
    %534 = arith.mulf %533, %532 : vector<1x256xf32>
    %c90 = arith.constant 90 : index
    %535 = memref.load %arg2[%c90] : memref<98xf32, #tpu.memory_space<smem>>
    %536 = vector.extract_strided_slice %38 {offsets = [0, 86], sizes = [1, 256], strides = [1, 1]} : vector<1x358xf32> to vector<1x256xf32>
    %537 = vector.broadcast %535 : f32 to vector<1x256xf32>
    %538 = arith.mulf %537, %536 : vector<1x256xf32>
    %539 = arith.addf %534, %538 : vector<1x256xf32>
    %540 = arith.addf %530, %539 : vector<1x256xf32>
    %c48 = arith.constant 48 : index
    %541 = memref.load %arg2[%c48] : memref<98xf32, #tpu.memory_space<smem>>
    %542 = vector.extract_strided_slice %37 {offsets = [0, 102], sizes = [1, 256], strides = [1, 1]} : vector<1x358xf32> to vector<1x256xf32>
    %543 = vector.broadcast %541 : f32 to vector<1x256xf32>
    %544 = arith.mulf %543, %542 : vector<1x256xf32>
    %c97 = arith.constant 97 : index
    %545 = memref.load %arg2[%c97] : memref<98xf32, #tpu.memory_space<smem>>
    %546 = vector.extract_strided_slice %38 {offsets = [0, 102], sizes = [1, 256], strides = [1, 1]} : vector<1x358xf32> to vector<1x256xf32>
    %547 = vector.broadcast %545 : f32 to vector<1x256xf32>
    %548 = arith.mulf %547, %546 : vector<1x256xf32>
    %549 = arith.addf %544, %548 : vector<1x256xf32>
    %550 = arith.addf %540, %549 : vector<1x256xf32>
    %cst_22 = arith.constant 0.000000e+00 : f32
    %551 = vector.broadcast %cst_22 : f32 to vector<1x256xf32>
    %552 = arith.select %481, %550, %551 : vector<1x256xi1>, vector<1x256xf32>
    %553 = arith.addf %479, %552 : vector<1x256xf32>
    %554 = arith.negf %553 : vector<1x256xf32>
    %555 = math.exp %554 : vector<1x256xf32>
    %cst_23 = arith.constant 1.000000e+00 : f32
    %556 = vector.broadcast %cst_23 : f32 to vector<1x256xf32>
    %557 = arith.addf %556, %555 : vector<1x256xf32>
    %558 = arith.divf %556, %557 : vector<1x256xf32>
    %559 = vector.shape_cast %558 : vector<1x256xf32> to vector<1x1x256xf32>
    %560 = vector.broadcast %559 : vector<1x1x256xf32> to vector<1x16x256xf32>
    %561 = arith.mulf %31, %560 : vector<1x16x256xf32>
    %c0_24 = arith.constant 0 : index
    %c0_25 = arith.constant 0 : index
    %c0_26 = arith.constant 0 : index
    %562 = vector.load %arg6[%c0_24, %c0_25, %c0_26] : memref<1x16x256xf32, #tpu.memory_space<vmem>>, vector<1x16x256xf32>
    tpu.vector_store %arg6[%c0_24, %c0_25, %c0_26], %561 {strides = array<i32>} : memref<1x16x256xf32, #tpu.memory_space<vmem>>, vector<1x16x256xf32>,
    return
  }
  func.func @transform_0(%arg0: i32) -> i32 {
    %c0_i32 = arith.constant 0 : i32
    %c0_i32_0 = arith.constant 0 : i32
    return %c0_i32 : i32
  }
  func.func @transform_1(%arg0: i32) -> i32 {
    %c0_i32 = arith.constant 0 : i32
    %c0_i32_0 = arith.constant 0 : i32
    return %c0_i32 : i32
  }
  func.func @transform_2(%arg0: i32) -> (i32, i32) {
    %c0_i32 = arith.constant 0 : i32
    %c0_i32_0 = arith.constant 0 : i32
    %c0_i32_1 = arith.constant 0 : i32
    return %c0_i32, %c0_i32_0 : i32, i32
  }
  func.func @transform_3(%arg0: i32) -> (i32, i32) {
    %c0_i32 = arith.constant 0 : i32
    %c0_i32_0 = arith.constant 0 : i32
    %c0_i32_1 = arith.constant 0 : i32
    return %c0_i32, %c0_i32_0 : i32, i32
  }
  func.func @transform_4(%arg0: i32) -> (i32, i32, i32) {
    %c0_i32 = arith.constant 0 : i32
    %c0_i32_0 = arith.constant 0 : i32
    %c0_i32_1 = arith.constant 0 : i32
    return %arg0, %c0_i32, %c0_i32_0 : i32, i32, i32
  }
  func.func @transform_5(%arg0: i32) -> (i32, i32, i32) {
    %c0_i32 = arith.constant 0 : i32
    %c0_i32_0 = arith.constant 0 : i32
    %c0_i32_1 = arith.constant 0 : i32
    return %arg0, %c0_i32, %c0_i32_0 : i32, i32, i32
  }
}

</mosaic_0001>

<llo_original>
// kernel: cbam_block_conv.1
$region0: #{cbam_block_conv.1}
  #allocation0 [shape = 'u32[]', space=smem, size = 0x4, offset = 0x4, fixed_abs, tag = 'smem constant byte address 0x4 - core index']
  #allocation1 [shape = 'u32[144,128]{1,0:T(1,128)}', space=vmem, size = 0x12000, scoped, tag = 'internal scratch']
  %s0 = inlined_call_operand.vmem [shape: f32[3], index: 0, kind: input, shape index: {}]
  %s1 = inlined_call_operand.vmem [shape: f32[98], index: 1, kind: input, shape index: {}]
  %s2 = inlined_call_operand.vmem [shape: s32[1,256], index: 2, kind: input, shape index: {}]
  %s3 = inlined_call_operand.vmem [shape: s32[1,256], index: 3, kind: input, shape index: {}]
  %s4 = inlined_call_operand.vmem [shape: f32[2,16,256], index: 4, kind: input, shape index: {}]
  %s5 = inlined_call_operand.vmem [shape: f32[2,16,256], index: 5, kind: output, shape index: {}]
  %s6 = sld [smem:[#allocation0]]
  $region61: #{cbam_block_conv.1} parent=0
    _
  %s8 = ssub.s32 1, %s6
  %s9 = scalar_select 0, %s8, %s6
  $region1: #{cbam_block_conv.1} parent=0
    #allocation2 [shape = 'u8[512]{0}', space=smem, size = 0x200, scoped, tag = 'input window, operand 0, single buffered']
    #allocation3 [shape = 's32[2]{0}', space=sflag, size = 0x8, scoped, tag = 'scoped memory for cbam_block_conv.1']
    #allocation4 [shape = 'u8[512]{0}', space=smem, size = 0x200, scoped, tag = 'input window, operand 1, single buffered']
    #allocation5 [shape = 's32[1]{0}', space=sflag, size = 0x4, scoped, tag = 'scoped memory for cbam_block_conv.1']
    %10 = vsyncpa [#allocation3], 0
    %11 = vsyncpa [#allocation5], 0
    loop: start=0, step=1, limit=4
    $region2: #{cbam_block_conv.1} parent=1 // loop_pre_header
      _
    $region3: #{cbam_block_conv.1} parent=1 // loop_header
      %s13 = sphi 0, %s17
      %p14 = scmp.ge.s32.totalorder %s13, 4
      %s21 = sphi 0, %s21
      %s23 = sphi 0, %s21
      %s24 = sphi 0, %s23
      %s38 = sphi 0, %s24
      %s42 = sphi 0, %s42
      %s44 = sphi 0, %s42
      %s45 = sphi 0, %s44
      %s59 = sphi 0, %s45
      %s63 = sphi 0, %s63
      %s65 = sphi 0, %s63
      %s66 = sphi 0, %s65
      %s80 = sphi 0, %s66
      %s84 = sphi 0, %s84
      %s86 = sphi 0, %s84
      %s87 = sphi 0, %s86
      %s101 = sphi 0, %s87
      %s107 = sphi 0, %s109
      %s110 = sphi 0, %s107
      %s111 = sphi 0, %s110
      %s127 = sphi 0, %s111
      %s133 = sphi 0, %s135
      %s136 = sphi 0, %s133
      %s137 = sphi 0, %s136
      %s153 = sphi 0, %s137
    $region4: #{cbam_block_conv.1} parent=1 // loop_header_branch
      %16 = sbr.rel (%p14) target = $region8
    $region5: #{cbam_block_conv.1} parent=1 // loop_body
      %s18 = ssub.s32 %s13, 1
      %s19 = ssub.s32 %s13, 2
      %s20 = sadd.s32 %s13, 1
      %s22 = sadd.s32 %s21, 1
      %p25 = scmp.eq.s32.totalorder %s13, 1
      %p26 = scmp.ne.s32.totalorder %s21, %s23
      %p27 = scmp.eq.s32.totalorder %s13, 0
      %p28 = por %p26, %p27
      %p29 = scmp.ne.s32.totalorder %s21, %s23
      %p30 = scmp.eq.s32.totalorder %s18, 1
      %p31 = por %p29, %p30
      %p32 = scmp.ne.s32.totalorder %s23, %s24
      %p33 = scmp.eq.s32.totalorder %s18, 0
      %p34 = por %p32, %p33
      %p35 = scmp.ne.s32.totalorder %s23, %s24
      %p36 = scmp.eq.s32.totalorder %s19, 1
      %p37 = por %p35, %p36
      %p39 = scmp.ne.s32.totalorder %s24, %s38
      %p40 = scmp.eq.s32.totalorder %s19, 0
      %p41 = por %p39, %p40
      %s43 = sadd.s32 %s42, 1
      %p46 = scmp.eq.s32.totalorder %s13, 1
      %p47 = scmp.ne.s32.totalorder %s42, %s44
      %p48 = scmp.eq.s32.totalorder %s13, 0
      %p49 = por %p47, %p48
      %p50 = scmp.ne.s32.totalorder %s42, %s44
      %p51 = scmp.eq.s32.totalorder %s18, 1
      %p52 = por %p50, %p51
      %p53 = scmp.ne.s32.totalorder %s44, %s45
      %p54 = scmp.eq.s32.totalorder %s18, 0
      %p55 = por %p53, %p54
      %p56 = scmp.ne.s32.totalorder %s44, %s45
      %p57 = scmp.eq.s32.totalorder %s19, 1
      %p58 = por %p56, %p57
      %p60 = scmp.ne.s32.totalorder %s45, %s59
      %p61 = scmp.eq.s32.totalorder %s19, 0
      %p62 = por %p60, %p61
      %s64 = sadd.s32 %s63, 1
      %p67 = scmp.eq.s32.totalorder %s13, 1
      %p68 = scmp.ne.s32.totalorder %s63, %s65
      %p69 = scmp.eq.s32.totalorder %s13, 0
      %p70 = por %p68, %p69
      %p71 = scmp.ne.s32.totalorder %s63, %s65
      %p72 = scmp.eq.s32.totalorder %s18, 1
      %p73 = por %p71, %p72
      %p74 = scmp.ne.s32.totalorder %s65, %s66
      %p75 = scmp.eq.s32.totalorder %s18, 0
      %p76 = por %p74, %p75
      %p77 = scmp.ne.s32.totalorder %s65, %s66
      %p78 = scmp.eq.s32.totalorder %s19, 1
      %p79 = por %p77, %p78
      %p81 = scmp.ne.s32.totalorder %s66, %s80
      %p82 = scmp.eq.s32.totalorder %s19, 0
      %p83 = por %p81, %p82
      %s85 = sadd.s32 %s84, 1
      %p88 = scmp.eq.s32.totalorder %s13, 1
      %p89 = scmp.ne.s32.totalorder %s84, %s86
      %p90 = scmp.eq.s32.totalorder %s13, 0
      %p91 = por %p89, %p90
      %p92 = scmp.ne.s32.totalorder %s84, %s86
      %p93 = scmp.eq.s32.totalorder %s18, 1
      %p94 = por %p92, %p93
      %p95 = scmp.ne.s32.totalorder %s86, %s87
      %p96 = scmp.eq.s32.totalorder %s18, 0
      %p97 = por %p95, %p96
      %p98 = scmp.ne.s32.totalorder %s86, %s87
      %p99 = scmp.eq.s32.totalorder %s19, 1
      %p100 = por %p98, %p99
      %p102 = scmp.ne.s32.totalorder %s87, %s101
      %p103 = scmp.eq.s32.totalorder %s19, 0
      %p104 = por %p102, %p103
      %s105 = ssub.s32 %s13, %s20
      %p106 = scmp.eq.s32.totalorder %s105, 0
      %s108 = sadd.s32 %s107, 1
      %s109 = scalar_select %p106, %s107, %s108
      %p112 = pneg %p106
      %p113 = scmp.eq.s32.totalorder %s13, 1
      %p114 = por %p112, %p113
      %p115 = scmp.ne.s32.totalorder %s107, %s110
      %p116 = scmp.eq.s32.totalorder %s13, 0
      %p117 = por %p115, %p116
      %p118 = scmp.ne.s32.totalorder %s107, %s110
      %p119 = scmp.eq.s32.totalorder %s18, 1
      %p120 = por %p118, %p119
      %p121 = scmp.ne.s32.totalorder %s110, %s111
      %p122 = scmp.eq.s32.totalorder %s18, 0
      %p123 = por %p121, %p122
      %p124 = scmp.ne.s32.totalorder %s110, %s111
      %p125 = scmp.eq.s32.totalorder %s19, 1
      %p126 = por %p124, %p125
      %p128 = scmp.ne.s32.totalorder %s111, %s127
      %p129 = scmp.eq.s32.totalorder %s19, 0
      %p130 = por %p128, %p129
      %s131 = ssub.s32 %s13, %s20
      %p132 = scmp.eq.s32.totalorder %s131, 0
      %s134 = sadd.s32 %s133, 1
      %s135 = scalar_select %p132, %s133, %s134
      %p138 = pneg %p132
      %p139 = scmp.eq.s32.totalorder %s13, 1
      %p140 = por %p138, %p139
      %p141 = scmp.ne.s32.totalorder %s133, %s136
      %p142 = scmp.eq.s32.totalorder %s13, 0
      %p143 = por %p141, %p142
      %p144 = scmp.ne.s32.totalorder %s133, %s136
      %p145 = scmp.eq.s32.totalorder %s18, 1
      %p146 = por %p144, %p145
      %p147 = scmp.ne.s32.totalorder %s136, %s137
      %p148 = scmp.eq.s32.totalorder %s18, 0
      %p149 = por %p147, %p148
      %p150 = scmp.ne.s32.totalorder %s136, %s137
      %p151 = scmp.eq.s32.totalorder %s19, 1
      %p152 = por %p150, %p151
      %p154 = scmp.ne.s32.totalorder %s137, %s153
      %p155 = scmp.eq.s32.totalorder %s19, 0
      %p156 = por %p154, %p155
      %p157 = scmp.le.s32.totalorder 1, %s13
      %p158 = scmp.lt.s32.totalorder %s13, 3
      %p159 = pnand %p157, %p158
      %p160 = pneg %p159
      // Predicated region
      $region9: #{cbam_block_conv.1} parent=5 // pred_check
        _
      $region10: #{cbam_block_conv.1} parent=5 // pred_check_branch
        %162 = sbr.rel (%p159) target = $region12
      $region11: #{cbam_block_conv.1} parent=5 // pred_region
        %s163 = ssub.s32 %s13, 1
        // Predicated region
        $region13: #{cbam_block_conv.1} parent=11 // pred_check
          %p164 = pneg %p34
        $region14: #{cbam_block_conv.1} parent=11 // pred_check_branch
          %166 = sbr.rel (%p164) target = $region16
        $region15: #{cbam_block_conv.1} parent=11 // pred_region
          %s168 = ssub.s32 16, 16
          %169 = vsyncadd [#allocation3], %s168
          %s171 = sshll.u32 %s0, 4
          %s172 = int_to_ptr.vmem [resolvable:$true] %s171
          %174 = dma.vmem_to_smem %s172, 16, [#allocation2], [#allocation3]
        $region16: #{cbam_block_conv.1} parent=11 // pred_fallthru
          _
        // Predicated region
        $region17: #{cbam_block_conv.1} parent=11 // pred_check
          %p175 = pneg %p55
        $region18: #{cbam_block_conv.1} parent=11 // pred_check_branch
          %177 = sbr.rel (%p175) target = $region20
        $region19: #{cbam_block_conv.1} parent=11 // pred_region
          %s179 = ssub.s32 16, 16
          %180 = vsyncadd [#allocation5], %s179
          %s182 = sshll.u32 %s1, 4
          %s183 = int_to_ptr.vmem [resolvable:$true] %s182
          %185 = dma.vmem_to_smem %s183, 16, [#allocation4], [#allocation5]
        $region20: #{cbam_block_conv.1} parent=11 // pred_fallthru
          _
        // Predicated region
        $region21: #{cbam_block_conv.1} parent=11 // pred_check
          %p186 = pneg %p76
        $region22: #{cbam_block_conv.1} parent=11 // pred_check_branch
          %188 = sbr.rel (%p186) target = $region24
        $region23: #{cbam_block_conv.1} parent=11 // pred_region
          _
        $region24: #{cbam_block_conv.1} parent=11 // pred_fallthru
          _
        // Predicated region
        $region25: #{cbam_block_conv.1} parent=11 // pred_check
          %p189 = pneg %p97
        $region26: #{cbam_block_conv.1} parent=11 // pred_check_branch
          %191 = sbr.rel (%p189) target = $region28
        $region27: #{cbam_block_conv.1} parent=11 // pred_region
          _
        $region28: #{cbam_block_conv.1} parent=11 // pred_fallthru
          _
      $region12: #{cbam_block_conv.1} parent=5 // pred_fallthru
        _
      %p192 = scmp.lt.s32.totalorder %s13, 2
      // Predicated region
      $region29: #{cbam_block_conv.1} parent=5 // pred_check
        %p193 = pneg %p192
      $region30: #{cbam_block_conv.1} parent=5 // pred_check_branch
        %195 = sbr.rel (%p193) target = $region32
      $region31: #{cbam_block_conv.1} parent=5 // pred_region
        // Predicated region
        $region33: #{cbam_block_conv.1} parent=31 // pred_check
          %p196 = pneg %p117
        $region34: #{cbam_block_conv.1} parent=31 // pred_check_branch
          %198 = sbr.rel (%p196) target = $region36
        $region35: #{cbam_block_conv.1} parent=31 // pred_region
          %p199 = scmp.lt.s32.totalorder %s13, 1
          %s200 = scalar_select %p199, %s13, 1
          %s201 = smul.addr %s200, 4
          %s202 = smul.addr %s201, 8
          %s203 = scalar_lea.vmem %s4, %s202
        $region36: #{cbam_block_conv.1} parent=31 // pred_fallthru
          _
      $region32: #{cbam_block_conv.1} parent=5 // pred_fallthru
        _
      %p204 = scmp.le.s32.totalorder 1, %s13
      %p205 = scmp.lt.s32.totalorder %s13, 3
      %p206 = pnand %p204, %p205
      %p207 = pneg %p206
      // Predicated region
      $region37: #{cbam_block_conv.1} parent=5 // pred_check
        _
      $region38: #{cbam_block_conv.1} parent=5 // pred_check_branch
        %209 = sbr.rel (%p206) target = $region40
      $region39: #{cbam_block_conv.1} parent=5 // pred_region
        %s210 = ssub.s32 %s13, 1
        // Predicated region
        $region41: #{cbam_block_conv.1} parent=39 // pred_check
          %p211 = pneg %p34
        $region42: #{cbam_block_conv.1} parent=39 // pred_check_branch
          %213 = sbr.rel (%p211) target = $region44
        $region43: #{cbam_block_conv.1} parent=39 // pred_region
          %214 = dma.done [#allocation3], 16
        $region44: #{cbam_block_conv.1} parent=39 // pred_fallthru
          _
        // Predicated region
        $region45: #{cbam_block_conv.1} parent=39 // pred_check
          %p215 = pneg %p55
        $region46: #{cbam_block_conv.1} parent=39 // pred_check_branch
          %217 = sbr.rel (%p215) target = $region48
        $region47: #{cbam_block_conv.1} parent=39 // pred_region
          %218 = dma.done [#allocation5], 16
        $region48: #{cbam_block_conv.1} parent=39 // pred_fallthru
          _
        %219 = sfence
        %p220 = pneg %p34
        %p221 = pneg %p31
        %p222 = pneg %p55
        %p223 = pneg %p52
        %p224 = pneg %p76
        %p225 = pneg %p73
        %p226 = pneg %p97
        %p227 = pneg %p94
        %p228 = scmp.lt.s32.totalorder %s18, 1
        %s229 = scalar_select %p228, %s18, 1
        %s230 = smul.addr %s229, 4
        %s231 = smul.addr %s230, 8
        %s232 = scalar_lea.vmem %s4, %s231
        %p233 = pneg %p123
        %p234 = pneg %p120
        %p235 = pneg %p149
        %p236 = pneg %p146
        %p237 = scmp.lt.s32.totalorder %s18, 1
        %s238 = scalar_select %p237, %s18, 1
        %s239 = smul.addr %s238, 4
        %s240 = smul.addr %s239, 8
        %s241 = scalar_lea.vmem %s5, %s240
        %p242 = scmp.lt.s32.totalorder %s18, 1
        %s243 = scalar_select %p242, %s18, 1
        %s244 = smul.addr %s243, 4
        %s245 = smul.addr %s244, 8
        %s246 = scalar_lea.vmem %s4, %s245
        %p247 = scmp.lt.s32.totalorder %s18, 1
        %s248 = scalar_select %p247, %s18, 1
        %s249 = smul.addr %s248, 4
        %s250 = smul.addr %s249, 8
        %s251 = scalar_lea.vmem %s5, %s250
        %v252 = vld [vmem:[%s246] sm:$0xff]
        %v253 = vld [vmem:[%s246 + $0x8] sm:$0xff]
        %v254 = vld [vmem:[%s246 + $0x10] sm:$0xff]
        %v255 = vld [vmem:[%s246 + $0x18] sm:$0xff]
        %v256 = vld [vmem:[%s3] sm:$0x3]
        %v257 = vadd.f32 %v252, %v253
        %258 = vadd.xlane.f32.xlu0 %v257
        %v259 = vpop.xlane.xlu0 %258
        %v260 = vadd.f32 %v254, %v255
        %261 = vadd.xlane.f32.xlu0 %v260
        %v262 = vpop.xlane.xlu0 %261
        %v263 = vmul.f32 %v259, 0.00390625
        %v264 = vmul.f32 %v262, 0.00390625
        %v265 = vmax.f32 %v252, %v253
        %266 = vmax.xlane.f32.xlu0 %v265
        %v267 = vpop.xlane.xlu0 %266
        %v268 = vmax.f32 %v254, %v255
        %269 = vmax.xlane.f32.xlu0 %v268
        %v270 = vpop.xlane.xlu0 %269
        %v271 = vadd.f32 %v263, %v267
        %v272 = vadd.f32 %v264, %v270
        %vm275 = vcmask 1040384
        %v276 = vrot.slane %v271, 7
        %v277 = vrot.slane %v272, 7
        %v278 = vsel %vm275, %v276, %v277
        %v282 = vsel %vm275, 0.0, %v276
        %v283 = vsel %vm275, %v277, 0.0
        %s284 = sld [smem:[#allocation2]]
        %v285 = vstv %s284
        %v286 = vmul.f32 %v285, %v282
        %v287 = vmul.f32 %v285, %v278
        %s288 = sld [smem:[#allocation2 + $0x1]]
        %v289 = vstv %s288
        %v290 = vmul.f32 %v289, %v282
        %v291 = vmul.f32 %v289, %v278
        %v292 = vmul.f32 %v289, %v283
        %vm296 = vcmask 1046528
        %v297 = vrot.slane %v290, 1
        %v298 = vrot.slane %v291, 1
        %v299 = vsel %vm296, %v297, %v298
        %v300 = vrot.slane %v292, 1
        %v301 = vsel %vm296, %v298, %v300
        %v304 = vadd.f32 %v286, %v299
        %v305 = vadd.f32 %v287, %v301
        %s306 = sld [smem:[#allocation2 + $0x2]]
        %v307 = vstv %s306
        %v308 = vmul.f32 %v307, %v282
        %v309 = vmul.f32 %v307, %v278
        %v310 = vmul.f32 %v307, %v283
        %vm314 = vcmask 1045504
        %v315 = vrot.slane %v308, 2
        %v316 = vrot.slane %v309, 2
        %v317 = vsel %vm314, %v315, %v316
        %v318 = vrot.slane %v310, 2
        %v319 = vsel %vm314, %v316, %v318
        %v322 = vadd.f32 %v304, %v317
        %v323 = vadd.f32 %v305, %v319
        %v324 = vxor.u32 %v322, 2147483648
        %v325 = vxor.u32 %v323, 2147483648
        %v326 = vmul.f32 %v324, 1.442695
        %v327 = vpow.pop %v326
        %v328 = vmul.f32 %v325, 1.442695
        %v329 = vpow.pop %v328
        %v330 = vadd.f32 %v327, 1.0
        %v331 = vadd.f32 %v329, 1.0
        %v332 = vrcp.pop %v330
        %v333 = vmul.f32 1.0, %v332
        %v334 = vrcp.pop %v331
        %v335 = vmul.f32 1.0, %v334
        %337 = vset.pattern.permute.xlu0 0
        %338 = vperm.xlu0 %337, %v333
        %v339 = vpop.permute.xlu0 %338
        %342 = vset.pattern.permute.xlu0 0
        %343 = vperm.xlu0 %342, %v335
        %v344 = vpop.permute.xlu0 %343
        %v346 = vmul.f32 %v252, %v339
        %v347 = vmul.f32 %v253, %v339
        %v348 = vmul.f32 %v254, %v344
        %v349 = vmul.f32 %v255, %v344
        %v350 = vmax.f32 %v346, %v348
        %v351 = vrot.slane %v350, 4
        %v352 = vmax.f32 %v350, %v351
        %v353 = vrot.slane %v352, 2
        %v354 = vmax.f32 %v352, %v353
        %v355 = vrot.slane %v354, 1
        %v356 = vmax.f32 %v354, %v355
        %v357 = vmax.f32 %v347, %v349
        %v358 = vrot.slane %v357, 4
        %v359 = vmax.f32 %v357, %v358
        %v360 = vrot.slane %v359, 2
        %v361 = vmax.f32 %v359, %v360
        %v362 = vrot.slane %v361, 1
        %v363 = vmax.f32 %v361, %v362
        %v364 = vadd.f32 %v346, %v348
        %v365 = vrot.slane %v364, 4
        %v366 = vadd.f32 %v364, %v365
        %v367 = vrot.slane %v366, 2
        %v368 = vadd.f32 %v366, %v367
        %v369 = vrot.slane %v368, 1
        %v370 = vadd.f32 %v368, %v369
        %v371 = vadd.f32 %v347, %v349
        %v372 = vrot.slane %v371, 4
        %v373 = vadd.f32 %v371, %v372
        %v374 = vrot.slane %v373, 2
        %v375 = vadd.f32 %v373, %v374
        %v376 = vrot.slane %v375, 1
        %v377 = vadd.f32 %v375, %v376
        %v378 = vmul.f32 %v370, 0.0625
        %v379 = vmul.f32 %v377, 0.0625
        %382 = vrot.lane.b32.xlu0 %v356, 51
        %v383 = vpop.permute.xlu0 %382
        %384 = vrot.lane.b32.xlu0 %v363, 51
        %v385 = vpop.permute.xlu0 %384
        %vm386 = vcmask 416768
        %v387 = vsel %vm386, %v383, %v385
        %v391 = vsel %vm386, 0.0, %v383
        %v392 = vsel %vm386, %v385, 0.0
        %395 = vrot.lane.b32.xlu0 %v378, 51
        %v396 = vpop.permute.xlu0 %395
        %397 = vrot.lane.b32.xlu0 %v379, 51
        %v398 = vpop.permute.xlu0 %397
        %v399 = vsel %vm386, %v396, %v398
        %v403 = vsel %vm386, 0.0, %v396
        %v404 = vsel %vm386, %v398, 0.0
        %vm405 = vcmp.ge.s32.totalorder %v256, 3
        %s406 = sld [smem:[#allocation4]]
        %v407 = vstv %s406
        %v408 = vmul.f32 %v407, %v391
        %v409 = vmul.f32 %v407, %v387
        %s410 = sld [smem:[#allocation4 + $0x31]]
        %v411 = vstv %s410
        %v412 = vmul.f32 %v411, %v403
        %v413 = vmul.f32 %v411, %v399
        %v414 = vadd.f32 %v408, %v412
        %v415 = vadd.f32 %v409, %v413
        %s416 = sld [smem:[#allocation4 + $0x7]]
        %v417 = vstv %s416
        %v418 = vmul.f32 %v417, %v391
        %v419 = vmul.f32 %v417, %v387
        %v420 = vmul.f32 %v417, %v392
        %s421 = sld [smem:[#allocation4 + $0x38]]
        %v422 = vstv %s421
        %v423 = vmul.f32 %v422, %v403
        %v424 = vmul.f32 %v422, %v399
        %v425 = vmul.f32 %v422, %v404
        %v426 = vadd.f32 %v418, %v423
        %v427 = vadd.f32 %v419, %v424
        %v428 = vadd.f32 %v420, %v425
        %432 = vrot.lane.b32.xlu0 %v426, 112
        %v433 = vpop.permute.xlu0 %432
        %434 = vrot.lane.b32.xlu0 %v427, 112
        %v435 = vpop.permute.xlu0 %434
        %436 = vrot.lane.b32.xlu0 %v428, 112
        %v437 = vpop.permute.xlu0 %436
        %vm438 = vcmask 916480
        %v439 = vsel %vm438, %v433, %v435
        %v440 = vsel %vm438, %v435, %v437
        %v443 = vadd.f32 %v414, %v439
        %v444 = vadd.f32 %v415, %v440
        %s445 = sld [smem:[#allocation4 + $0xe]]
        %v446 = vstv %s445
        %v447 = vmul.f32 %v446, %v391
        %v448 = vmul.f32 %v446, %v387
        %v449 = vmul.f32 %v446, %v392
        %s450 = sld [smem:[#allocation4 + $0x3f]]
        %v451 = vstv %s450
        %v452 = vmul.f32 %v451, %v403
        %v453 = vmul.f32 %v451, %v399
        %v454 = vmul.f32 %v451, %v404
        %v455 = vadd.f32 %v447, %v452
        %v456 = vadd.f32 %v448, %v453
        %v457 = vadd.f32 %v449, %v454
        %461 = vrot.lane.b32.xlu0 %v455, 96
        %v462 = vpop.permute.xlu0 %461
        %463 = vrot.lane.b32.xlu0 %v456, 96
        %v464 = vpop.permute.xlu0 %463
        %465 = vrot.lane.b32.xlu0 %v457, 96
        %v466 = vpop.permute.xlu0 %465
        %vm467 = vcmask 785408
        %v468 = vsel %vm467, %v462, %v464
        %v469 = vsel %vm467, %v464, %v466
        %v472 = vadd.f32 %v443, %v468
        %v473 = vadd.f32 %v444, %v469
        %s474 = sld [smem:[#allocation4 + $0x15]]
        %v475 = vstv %s474
        %v476 = vmul.f32 %v475, %v391
        %v477 = vmul.f32 %v475, %v387
        %v478 = vmul.f32 %v475, %v392
        %s479 = sld [smem:[#allocation4 + $0x46]]
        %v480 = vstv %s479
        %v481 = vmul.f32 %v480, %v403
        %v482 = vmul.f32 %v480, %v399
        %v483 = vmul.f32 %v480, %v404
        %v484 = vadd.f32 %v476, %v481
        %v485 = vadd.f32 %v477, %v482
        %v486 = vadd.f32 %v478, %v483
        %490 = vrot.lane.b32.xlu0 %v484, 80
        %v491 = vpop.permute.xlu0 %490
        %492 = vrot.lane.b32.xlu0 %v485, 80
        %v493 = vpop.permute.xlu0 %492
        %494 = vrot.lane.b32.xlu0 %v486, 80
        %v495 = vpop.permute.xlu0 %494
        %vm496 = vcmask 654336
        %v497 = vsel %vm496, %v491, %v493
        %v498 = vsel %vm496, %v493, %v495
        %v501 = vadd.f32 %v472, %v497
        %v502 = vadd.f32 %v473, %v498
        %s503 = sld [smem:[#allocation4 + $0x1c]]
        %v504 = vstv %s503
        %v505 = vmul.f32 %v504, %v391
        %v506 = vmul.f32 %v504, %v387
        %v507 = vmul.f32 %v504, %v392
        %s508 = sld [smem:[#allocation4 + $0x4d]]
        %v509 = vstv %s508
        %v510 = vmul.f32 %v509, %v403
        %v511 = vmul.f32 %v509, %v399
        %v512 = vmul.f32 %v509, %v404
        %v513 = vadd.f32 %v505, %v510
        %v514 = vadd.f32 %v506, %v511
        %v515 = vadd.f32 %v507, %v512
        %519 = vrot.lane.b32.xlu0 %v513, 64
        %v520 = vpop.permute.xlu0 %519
        %521 = vrot.lane.b32.xlu0 %v514, 64
        %v522 = vpop.permute.xlu0 %521
        %523 = vrot.lane.b32.xlu0 %v515, 64
        %v524 = vpop.permute.xlu0 %523
        %vm525 = vcmask 523264
        %v526 = vsel %vm525, %v520, %v522
        %v527 = vsel %vm525, %v522, %v524
        %v530 = vadd.f32 %v501, %v526
        %v531 = vadd.f32 %v502, %v527
        %s532 = sld [smem:[#allocation4 + $0x23]]
        %v533 = vstv %s532
        %v534 = vmul.f32 %v533, %v391
        %v535 = vmul.f32 %v533, %v387
        %v536 = vmul.f32 %v533, %v392
        %s537 = sld [smem:[#allocation4 + $0x54]]
        %v538 = vstv %s537
        %v539 = vmul.f32 %v538, %v403
        %v540 = vmul.f32 %v538, %v399
        %v541 = vmul.f32 %v538, %v404
        %v542 = vadd.f32 %v534, %v539
        %v543 = vadd.f32 %v535, %v540
        %v544 = vadd.f32 %v536, %v541
        %548 = vrot.lane.b32.xlu0 %v542, 48
        %v549 = vpop.permute.xlu0 %548
        %550 = vrot.lane.b32.xlu0 %v543, 48
        %v551 = vpop.permute.xlu0 %550
        %552 = vrot.lane.b32.xlu0 %v544, 48
        %v553 = vpop.permute.xlu0 %552
        %vm554 = vcmask 392192
        %v555 = vsel %vm554, %v549, %v551
        %v556 = vsel %vm554, %v551, %v553
        %v559 = vadd.f32 %v530, %v555
        %v560 = vadd.f32 %v531, %v556
        %s561 = sld [smem:[#allocation4 + $0x2a]]
        %v562 = vstv %s561
        %v563 = vmul.f32 %v562, %v391
        %v564 = vmul.f32 %v562, %v387
        %v565 = vmul.f32 %v562, %v392
        %s566 = sld [smem:[#allocation4 + $0x5b]]
        %v567 = vstv %s566
        %v568 = vmul.f32 %v567, %v403
        %v569 = vmul.f32 %v567, %v399
        %v570 = vmul.f32 %v567, %v404
        %v571 = vadd.f32 %v563, %v568
        %v572 = vadd.f32 %v564, %v569
        %v573 = vadd.f32 %v565, %v570
        %577 = vrot.lane.b32.xlu0 %v571, 32
        %v578 = vpop.permute.xlu0 %577
        %579 = vrot.lane.b32.xlu0 %v572, 32
        %v580 = vpop.permute.xlu0 %579
        %581 = vrot.lane.b32.xlu0 %v573, 32
        %v582 = vpop.permute.xlu0 %581
        %vm583 = vcmask 261120
        %v584 = vsel %vm583, %v578, %v580
        %v585 = vsel %vm583, %v580, %v582
        %v588 = vadd.f32 %v559, %v584
        %v589 = vadd.f32 %v560, %v585
        %v592 = vcombine.low %v588, %v589
        %v594 = vunpack.c.l.s4 1966171168
        %v595 = vunpack.c.0.s8 %v594
        %v596 = vlaneseq
        %v597 = vshrl.u32 %v596, 7
        %v598 = vsub.s32 %v595, %v597
        %v599 = vrot.slane %v592, %v598
        %v601 = vunpack.c.l.s4 1966171168
        %v602 = vunpack.c.0.s8 %v601
        %v603 = vlaneseq
        %v604 = vshrl.u32 %v603, 7
        %v605 = vsub.s32 %v602, %v604
        %v606 = vrot.slane %v599, %v605
        %v608 = vsel %vm405, %v606, 0.0
        %v609 = vadd.f32 %v608, 0.0
        %vm610 = vcmp.ge.s32.totalorder %v256, 2
        %s611 = sld [smem:[#allocation4 + $0x1]]
        %v612 = vstv %s611
        %v613 = vmul.f32 %v612, %v391
        %v614 = vmul.f32 %v612, %v387
        %v615 = vmul.f32 %v612, %v392
        %s616 = sld [smem:[#allocation4 + $0x32]]
        %v617 = vstv %s616
        %v618 = vmul.f32 %v617, %v403
        %v619 = vmul.f32 %v617, %v399
        %v620 = vmul.f32 %v617, %v404
        %v621 = vadd.f32 %v613, %v618
        %v622 = vadd.f32 %v614, %v619
        %v623 = vadd.f32 %v615, %v620
        %s624 = sld [smem:[#allocation4 + $0x8]]
        %v625 = vstv %s624
        %v626 = vmul.f32 %v625, %v391
        %v627 = vmul.f32 %v625, %v387
        %v628 = vmul.f32 %v625, %v392
        %s629 = sld [smem:[#allocation4 + $0x39]]
        %v630 = vstv %s629
        %v631 = vmul.f32 %v630, %v403
        %v632 = vmul.f32 %v630, %v399
        %v633 = vmul.f32 %v630, %v404
        %v634 = vadd.f32 %v626, %v631
        %v635 = vadd.f32 %v627, %v632
        %v636 = vadd.f32 %v628, %v633
        %640 = vrot.lane.b32.xlu0 %v634, 112
        %v641 = vpop.permute.xlu0 %640
        %642 = vrot.lane.b32.xlu0 %v635, 112
        %v643 = vpop.permute.xlu0 %642
        %644 = vrot.lane.b32.xlu0 %v636, 112
        %v645 = vpop.permute.xlu0 %644
        %v646 = vsel %vm438, %v641, %v643
        %v647 = vsel %vm438, %v643, %v645
        %v651 = vadd.f32 %v621, %v646
        %v652 = vadd.f32 %v622, %v647
        %v653 = vadd.f32 %v623, %v645
        %s654 = sld [smem:[#allocation4 + $0xf]]
        %v655 = vstv %s654
        %v656 = vmul.f32 %v655, %v391
        %v657 = vmul.f32 %v655, %v387
        %v658 = vmul.f32 %v655, %v392
        %s659 = sld [smem:[#allocation4 + $0x40]]
        %v660 = vstv %s659
        %v661 = vmul.f32 %v660, %v403
        %v662 = vmul.f32 %v660, %v399
        %v663 = vmul.f32 %v660, %v404
        %v664 = vadd.f32 %v656, %v661
        %v665 = vadd.f32 %v657, %v662
        %v666 = vadd.f32 %v658, %v663
        %670 = vrot.lane.b32.xlu0 %v664, 96
        %v671 = vpop.permute.xlu0 %670
        %672 = vrot.lane.b32.xlu0 %v665, 96
        %v673 = vpop.permute.xlu0 %672
        %674 = vrot.lane.b32.xlu0 %v666, 96
        %v675 = vpop.permute.xlu0 %674
        %v676 = vsel %vm467, %v671, %v673
        %v677 = vsel %vm467, %v673, %v675
        %v681 = vadd.f32 %v651, %v676
        %v682 = vadd.f32 %v652, %v677
        %v683 = vadd.f32 %v653, %v675
        %s684 = sld [smem:[#allocation4 + $0x16]]
        %v685 = vstv %s684
        %v686 = vmul.f32 %v685, %v391
        %v687 = vmul.f32 %v685, %v387
        %v688 = vmul.f32 %v685, %v392
        %s689 = sld [smem:[#allocation4 + $0x47]]
        %v690 = vstv %s689
        %v691 = vmul.f32 %v690, %v403
        %v692 = vmul.f32 %v690, %v399
        %v693 = vmul.f32 %v690, %v404
        %v694 = vadd.f32 %v686, %v691
        %v695 = vadd.f32 %v687, %v692
        %v696 = vadd.f32 %v688, %v693
        %700 = vrot.lane.b32.xlu0 %v694, 80
        %v701 = vpop.permute.xlu0 %700
        %702 = vrot.lane.b32.xlu0 %v695, 80
        %v703 = vpop.permute.xlu0 %702
        %704 = vrot.lane.b32.xlu0 %v696, 80
        %v705 = vpop.permute.xlu0 %704
        %v706 = vsel %vm496, %v701, %v703
        %v707 = vsel %vm496, %v703, %v705
        %v711 = vadd.f32 %v681, %v706
        %v712 = vadd.f32 %v682, %v707
        %v713 = vadd.f32 %v683, %v705
        %s714 = sld [smem:[#allocation4 + $0x1d]]
        %v715 = vstv %s714
        %v716 = vmul.f32 %v715, %v391
        %v717 = vmul.f32 %v715, %v387
        %v718 = vmul.f32 %v715, %v392
        %s719 = sld [smem:[#allocation4 + $0x4e]]
        %v720 = vstv %s719
        %v721 = vmul.f32 %v720, %v403
        %v722 = vmul.f32 %v720, %v399
        %v723 = vmul.f32 %v720, %v404
        %v724 = vadd.f32 %v716, %v721
        %v725 = vadd.f32 %v717, %v722
        %v726 = vadd.f32 %v718, %v723
        %730 = vrot.lane.b32.xlu0 %v724, 64
        %v731 = vpop.permute.xlu0 %730
        %732 = vrot.lane.b32.xlu0 %v725, 64
        %v733 = vpop.permute.xlu0 %732
        %734 = vrot.lane.b32.xlu0 %v726, 64
        %v735 = vpop.permute.xlu0 %734
        %v736 = vsel %vm525, %v731, %v733
        %v737 = vsel %vm525, %v733, %v735
        %v741 = vadd.f32 %v711, %v736
        %v742 = vadd.f32 %v712, %v737
        %v743 = vadd.f32 %v713, %v735
        %s744 = sld [smem:[#allocation4 + $0x24]]
        %v745 = vstv %s744
        %v746 = vmul.f32 %v745, %v391
        %v747 = vmul.f32 %v745, %v387
        %v748 = vmul.f32 %v745, %v392
        %s749 = sld [smem:[#allocation4 + $0x55]]
        %v750 = vstv %s749
        %v751 = vmul.f32 %v750, %v403
        %v752 = vmul.f32 %v750, %v399
        %v753 = vmul.f32 %v750, %v404
        %v754 = vadd.f32 %v746, %v751
        %v755 = vadd.f32 %v747, %v752
        %v756 = vadd.f32 %v748, %v753
        %760 = vrot.lane.b32.xlu0 %v754, 48
        %v761 = vpop.permute.xlu0 %760
        %762 = vrot.lane.b32.xlu0 %v755, 48
        %v763 = vpop.permute.xlu0 %762
        %764 = vrot.lane.b32.xlu0 %v756, 48
        %v765 = vpop.permute.xlu0 %764
        %v766 = vsel %vm554, %v761, %v763
        %v767 = vsel %vm554, %v763, %v765
        %v771 = vadd.f32 %v741, %v766
        %v772 = vadd.f32 %v742, %v767
        %v773 = vadd.f32 %v743, %v765
        %s774 = sld [smem:[#allocation4 + $0x2b]]
        %v775 = vstv %s774
        %v776 = vmul.f32 %v775, %v391
        %v777 = vmul.f32 %v775, %v387
        %v778 = vmul.f32 %v775, %v392
        %s779 = sld [smem:[#allocation4 + $0x5c]]
        %v780 = vstv %s779
        %v781 = vmul.f32 %v780, %v403
        %v782 = vmul.f32 %v780, %v399
        %v783 = vmul.f32 %v780, %v404
        %v784 = vadd.f32 %v776, %v781
        %v785 = vadd.f32 %v777, %v782
        %v786 = vadd.f32 %v778, %v783
        %790 = vrot.lane.b32.xlu0 %v784, 32
        %v791 = vpop.permute.xlu0 %790
        %792 = vrot.lane.b32.xlu0 %v785, 32
        %v793 = vpop.permute.xlu0 %792
        %794 = vrot.lane.b32.xlu0 %v786, 32
        %v795 = vpop.permute.xlu0 %794
        %v796 = vsel %vm583, %v791, %v793
        %v797 = vsel %vm583, %v793, %v795
        %v801 = vadd.f32 %v771, %v796
        %v802 = vadd.f32 %v772, %v797
        %v803 = vadd.f32 %v773, %v795
        %v807 = vcombine.low %v801, %v802
        %v809 = vunpack.c.l.s4 1966171168
        %v810 = vunpack.c.0.s8 %v809
        %v811 = vlaneseq
        %v812 = vshrl.u32 %v811, 7
        %v813 = vsub.s32 %v810, %v812
        %v814 = vrot.slane %v807, %v813
        %v816 = vunpack.c.l.s4 1966171168
        %v817 = vunpack.c.0.s8 %v816
        %v818 = vlaneseq
        %v819 = vshrl.u32 %v818, 7
        %v820 = vsub.s32 %v817, %v819
        %v821 = vrot.slane %v803, %v820
        %v822 = vcombine.low %v814, %v821
        %v824 = vunpack.c.l.s4 1966171168
        %v825 = vunpack.c.0.s8 %v824
        %v826 = vlaneseq
        %v827 = vshrl.u32 %v826, 7
        %v828 = vsub.s32 %v825, %v827
        %v829 = vrot.slane %v822, %v828
        %830 = vrot.lane.b32.xlu0 %v829, 127
        %v831 = vpop.permute.xlu0 %830
        %v832 = vrot.slane %v831, 1
        %vm833 = vcmask 1039360
        %v834 = vsel %vm833, %v831, %v832
        %v836 = vsel %vm610, %v834, 0.0
        %v837 = vadd.f32 %v609, %v836
        %vm838 = vcmp.ge.s32.totalorder %v256, 1
        %s839 = sld [smem:[#allocation4 + $0x2]]
        %v840 = vstv %s839
        %v841 = vmul.f32 %v840, %v391
        %v842 = vmul.f32 %v840, %v387
        %v843 = vmul.f32 %v840, %v392
        %s844 = sld [smem:[#allocation4 + $0x33]]
        %v845 = vstv %s844
        %v846 = vmul.f32 %v845, %v403
        %v847 = vmul.f32 %v845, %v399
        %v848 = vmul.f32 %v845, %v404
        %v849 = vadd.f32 %v841, %v846
        %v850 = vadd.f32 %v842, %v847
        %v851 = vadd.f32 %v843, %v848
        %s852 = sld [smem:[#allocation4 + $0x9]]
        %v853 = vstv %s852
        %v854 = vmul.f32 %v853, %v391
        %v855 = vmul.f32 %v853, %v387
        %v856 = vmul.f32 %v853, %v392
        %s857 = sld [smem:[#allocation4 + $0x3a]]
        %v858 = vstv %s857
        %v859 = vmul.f32 %v858, %v403
        %v860 = vmul.f32 %v858, %v399
        %v861 = vmul.f32 %v858, %v404
        %v862 = vadd.f32 %v854, %v859
        %v863 = vadd.f32 %v855, %v860
        %v864 = vadd.f32 %v856, %v861
        %868 = vrot.lane.b32.xlu0 %v862, 112
        %v869 = vpop.permute.xlu0 %868
        %870 = vrot.lane.b32.xlu0 %v863, 112
        %v871 = vpop.permute.xlu0 %870
        %872 = vrot.lane.b32.xlu0 %v864, 112
        %v873 = vpop.permute.xlu0 %872
        %v874 = vsel %vm438, %v869, %v871
        %v875 = vsel %vm438, %v871, %v873
        %v879 = vadd.f32 %v849, %v874
        %v880 = vadd.f32 %v850, %v875
        %v881 = vadd.f32 %v851, %v873
        %s882 = sld [smem:[#allocation4 + $0x10]]
        %v883 = vstv %s882
        %v884 = vmul.f32 %v883, %v391
        %v885 = vmul.f32 %v883, %v387
        %v886 = vmul.f32 %v883, %v392
        %s887 = sld [smem:[#allocation4 + $0x41]]
        %v888 = vstv %s887
        %v889 = vmul.f32 %v888, %v403
        %v890 = vmul.f32 %v888, %v399
        %v891 = vmul.f32 %v888, %v404
        %v892 = vadd.f32 %v884, %v889
        %v893 = vadd.f32 %v885, %v890
        %v894 = vadd.f32 %v886, %v891
        %898 = vrot.lane.b32.xlu0 %v892, 96
        %v899 = vpop.permute.xlu0 %898
        %900 = vrot.lane.b32.xlu0 %v893, 96
        %v901 = vpop.permute.xlu0 %900
        %902 = vrot.lane.b32.xlu0 %v894, 96
        %v903 = vpop.permute.xlu0 %902
        %v904 = vsel %vm467, %v899, %v901
        %v905 = vsel %vm467, %v901, %v903
        %v909 = vadd.f32 %v879, %v904
        %v910 = vadd.f32 %v880, %v905
        %v911 = vadd.f32 %v881, %v903
        %s912 = sld [smem:[#allocation4 + $0x17]]
        %v913 = vstv %s912
        %v914 = vmul.f32 %v913, %v391
        %v915 = vmul.f32 %v913, %v387
        %v916 = vmul.f32 %v913, %v392
        %s917 = sld [smem:[#allocation4 + $0x48]]
        %v918 = vstv %s917
        %v919 = vmul.f32 %v918, %v403
        %v920 = vmul.f32 %v918, %v399
        %v921 = vmul.f32 %v918, %v404
        %v922 = vadd.f32 %v914, %v919
        %v923 = vadd.f32 %v915, %v920
        %v924 = vadd.f32 %v916, %v921
        %928 = vrot.lane.b32.xlu0 %v922, 80
        %v929 = vpop.permute.xlu0 %928
        %930 = vrot.lane.b32.xlu0 %v923, 80
        %v931 = vpop.permute.xlu0 %930
        %932 = vrot.lane.b32.xlu0 %v924, 80
        %v933 = vpop.permute.xlu0 %932
        %v934 = vsel %vm496, %v929, %v931
        %v935 = vsel %vm496, %v931, %v933
        %v939 = vadd.f32 %v909, %v934
        %v940 = vadd.f32 %v910, %v935
        %v941 = vadd.f32 %v911, %v933
        %s942 = sld [smem:[#allocation4 + $0x1e]]
        %v943 = vstv %s942
        %v944 = vmul.f32 %v943, %v391
        %v945 = vmul.f32 %v943, %v387
        %v946 = vmul.f32 %v943, %v392
        %s947 = sld [smem:[#allocation4 + $0x4f]]
        %v948 = vstv %s947
        %v949 = vmul.f32 %v948, %v403
        %v950 = vmul.f32 %v948, %v399
        %v951 = vmul.f32 %v948, %v404
        %v952 = vadd.f32 %v944, %v949
        %v953 = vadd.f32 %v945, %v950
        %v954 = vadd.f32 %v946, %v951
        %958 = vrot.lane.b32.xlu0 %v952, 64
        %v959 = vpop.permute.xlu0 %958
        %960 = vrot.lane.b32.xlu0 %v953, 64
        %v961 = vpop.permute.xlu0 %960
        %962 = vrot.lane.b32.xlu0 %v954, 64
        %v963 = vpop.permute.xlu0 %962
        %v964 = vsel %vm525, %v959, %v961
        %v965 = vsel %vm525, %v961, %v963
        %v969 = vadd.f32 %v939, %v964
        %v970 = vadd.f32 %v940, %v965
        %v971 = vadd.f32 %v941, %v963
        %s972 = sld [smem:[#allocation4 + $0x25]]
        %v973 = vstv %s972
        %v974 = vmul.f32 %v973, %v391
        %v975 = vmul.f32 %v973, %v387
        %v976 = vmul.f32 %v973, %v392
        %s977 = sld [smem:[#allocation4 + $0x56]]
        %v978 = vstv %s977
        %v979 = vmul.f32 %v978, %v403
        %v980 = vmul.f32 %v978, %v399
        %v981 = vmul.f32 %v978, %v404
        %v982 = vadd.f32 %v974, %v979
        %v983 = vadd.f32 %v975, %v980
        %v984 = vadd.f32 %v976, %v981
        %988 = vrot.lane.b32.xlu0 %v982, 48
        %v989 = vpop.permute.xlu0 %988
        %990 = vrot.lane.b32.xlu0 %v983, 48
        %v991 = vpop.permute.xlu0 %990
        %992 = vrot.lane.b32.xlu0 %v984, 48
        %v993 = vpop.permute.xlu0 %992
        %v994 = vsel %vm554, %v989, %v991
        %v995 = vsel %vm554, %v991, %v993
        %v999 = vadd.f32 %v969, %v994
        %v1000 = vadd.f32 %v970, %v995
        %v1001 = vadd.f32 %v971, %v993
        %s1002 = sld [smem:[#allocation4 + $0x2c]]
        %v1003 = vstv %s1002
        %v1004 = vmul.f32 %v1003, %v391
        %v1005 = vmul.f32 %v1003, %v387
        %v1006 = vmul.f32 %v1003, %v392
        %s1007 = sld [smem:[#allocation4 + $0x5d]]
        %v1008 = vstv %s1007
        %v1009 = vmul.f32 %v1008, %v403
        %v1010 = vmul.f32 %v1008, %v399
        %v1011 = vmul.f32 %v1008, %v404
        %v1012 = vadd.f32 %v1004, %v1009
        %v1013 = vadd.f32 %v1005, %v1010
        %v1014 = vadd.f32 %v1006, %v1011
        %1018 = vrot.lane.b32.xlu0 %v1012, 32
        %v1019 = vpop.permute.xlu0 %1018
        %1020 = vrot.lane.b32.xlu0 %v1013, 32
        %v1021 = vpop.permute.xlu0 %1020
        %1022 = vrot.lane.b32.xlu0 %v1014, 32
        %v1023 = vpop.permute.xlu0 %1022
        %v1024 = vsel %vm583, %v1019, %v1021
        %v1025 = vsel %vm583, %v1021, %v1023
        %v1029 = vadd.f32 %v999, %v1024
        %v1030 = vadd.f32 %v1000, %v1025
        %v1031 = vadd.f32 %v1001, %v1023
        %v1035 = vcombine.low %v1029, %v1030
        %v1037 = vunpack.c.l.s4 1966171168
        %v1038 = vunpack.c.0.s8 %v1037
        %v1039 = vlaneseq
        %v1040 = vshrl.u32 %v1039, 7
        %v1041 = vsub.s32 %v1038, %v1040
        %v1042 = vrot.slane %v1035, %v1041
        %v1044 = vunpack.c.l.s4 1966171168
        %v1045 = vunpack.c.0.s8 %v1044
        %v1046 = vlaneseq
        %v1047 = vshrl.u32 %v1046, 7
        %v1048 = vsub.s32 %v1045, %v1047
        %v1049 = vrot.slane %v1031, %v1048
        %v1050 = vcombine.low %v1042, %v1049
        %v1052 = vunpack.c.l.s4 1966171168
        %v1053 = vunpack.c.0.s8 %v1052
        %v1054 = vlaneseq
        %v1055 = vshrl.u32 %v1054, 7
        %v1056 = vsub.s32 %v1053, %v1055
        %v1057 = vrot.slane %v1050, %v1056
        %1058 = vrot.lane.b32.xlu0 %v1057, 126
        %v1059 = vpop.permute.xlu0 %1058
        %v1060 = vrot.slane %v1059, 1
        %vm1061 = vcmask 1031168
        %v1062 = vsel %vm1061, %v1059, %v1060
        %v1064 = vsel %vm838, %v1062, 0.0
        %v1065 = vadd.f32 %v837, %v1064
        %s1066 = sld [smem:[#allocation4 + $0x3]]
        %v1067 = vstv %s1066
        %v1068 = vmul.f32 %v1067, %v391
        %v1069 = vmul.f32 %v1067, %v387
        %v1070 = vmul.f32 %v1067, %v392
        %s1071 = sld [smem:[#allocation4 + $0x34]]
        %v1072 = vstv %s1071
        %v1073 = vmul.f32 %v1072, %v403
        %v1074 = vmul.f32 %v1072, %v399
        %v1075 = vmul.f32 %v1072, %v404
        %v1076 = vadd.f32 %v1068, %v1073
        %v1077 = vadd.f32 %v1069, %v1074
        %v1078 = vadd.f32 %v1070, %v1075
        %s1079 = sld [smem:[#allocation4 + $0xa]]
        %v1080 = vstv %s1079
        %v1081 = vmul.f32 %v1080, %v391
        %v1082 = vmul.f32 %v1080, %v387
        %v1083 = vmul.f32 %v1080, %v392
        %s1084 = sld [smem:[#allocation4 + $0x3b]]
        %v1085 = vstv %s1084
        %v1086 = vmul.f32 %v1085, %v403
        %v1087 = vmul.f32 %v1085, %v399
        %v1088 = vmul.f32 %v1085, %v404
        %v1089 = vadd.f32 %v1081, %v1086
        %v1090 = vadd.f32 %v1082, %v1087
        %v1091 = vadd.f32 %v1083, %v1088
        %1095 = vrot.lane.b32.xlu0 %v1089, 112
        %v1096 = vpop.permute.xlu0 %1095
        %1097 = vrot.lane.b32.xlu0 %v1090, 112
        %v1098 = vpop.permute.xlu0 %1097
        %1099 = vrot.lane.b32.xlu0 %v1091, 112
        %v1100 = vpop.permute.xlu0 %1099
        %v1101 = vsel %vm438, %v1096, %v1098
        %v1102 = vsel %vm438, %v1098, %v1100
        %v1106 = vadd.f32 %v1076, %v1101
        %v1107 = vadd.f32 %v1077, %v1102
        %v1108 = vadd.f32 %v1078, %v1100
        %s1109 = sld [smem:[#allocation4 + $0x11]]
        %v1110 = vstv %s1109
        %v1111 = vmul.f32 %v1110, %v391
        %v1112 = vmul.f32 %v1110, %v387
        %v1113 = vmul.f32 %v1110, %v392
        %s1114 = sld [smem:[#allocation4 + $0x42]]
        %v1115 = vstv %s1114
        %v1116 = vmul.f32 %v1115, %v403
        %v1117 = vmul.f32 %v1115, %v399
        %v1118 = vmul.f32 %v1115, %v404
        %v1119 = vadd.f32 %v1111, %v1116
        %v1120 = vadd.f32 %v1112, %v1117
        %v1121 = vadd.f32 %v1113, %v1118
        %1125 = vrot.lane.b32.xlu0 %v1119, 96
        %v1126 = vpop.permute.xlu0 %1125
        %1127 = vrot.lane.b32.xlu0 %v1120, 96
        %v1128 = vpop.permute.xlu0 %1127
        %1129 = vrot.lane.b32.xlu0 %v1121, 96
        %v1130 = vpop.permute.xlu0 %1129
        %v1131 = vsel %vm467, %v1126, %v1128
        %v1132 = vsel %vm467, %v1128, %v1130
        %v1136 = vadd.f32 %v1106, %v1131
        %v1137 = vadd.f32 %v1107, %v1132
        %v1138 = vadd.f32 %v1108, %v1130
        %s1139 = sld [smem:[#allocation4 + $0x18]]
        %v1140 = vstv %s1139
        %v1141 = vmul.f32 %v1140, %v391
        %v1142 = vmul.f32 %v1140, %v387
        %v1143 = vmul.f32 %v1140, %v392
        %s1144 = sld [smem:[#allocation4 + $0x49]]
        %v1145 = vstv %s1144
        %v1146 = vmul.f32 %v1145, %v403
        %v1147 = vmul.f32 %v1145, %v399
        %v1148 = vmul.f32 %v1145, %v404
        %v1149 = vadd.f32 %v1141, %v1146
        %v1150 = vadd.f32 %v1142, %v1147
        %v1151 = vadd.f32 %v1143, %v1148
        %1155 = vrot.lane.b32.xlu0 %v1149, 80
        %v1156 = vpop.permute.xlu0 %1155
        %1157 = vrot.lane.b32.xlu0 %v1150, 80
        %v1158 = vpop.permute.xlu0 %1157
        %1159 = vrot.lane.b32.xlu0 %v1151, 80
        %v1160 = vpop.permute.xlu0 %1159
        %v1161 = vsel %vm496, %v1156, %v1158
        %v1162 = vsel %vm496, %v1158, %v1160
        %v1166 = vadd.f32 %v1136, %v1161
        %v1167 = vadd.f32 %v1137, %v1162
        %v1168 = vadd.f32 %v1138, %v1160
        %s1169 = sld [smem:[#allocation4 + $0x1f]]
        %v1170 = vstv %s1169
        %v1171 = vmul.f32 %v1170, %v391
        %v1172 = vmul.f32 %v1170, %v387
        %v1173 = vmul.f32 %v1170, %v392
        %s1174 = sld [smem:[#allocation4 + $0x50]]
        %v1175 = vstv %s1174
        %v1176 = vmul.f32 %v1175, %v403
        %v1177 = vmul.f32 %v1175, %v399
        %v1178 = vmul.f32 %v1175, %v404
        %v1179 = vadd.f32 %v1171, %v1176
        %v1180 = vadd.f32 %v1172, %v1177
        %v1181 = vadd.f32 %v1173, %v1178
        %1185 = vrot.lane.b32.xlu0 %v1179, 64
        %v1186 = vpop.permute.xlu0 %1185
        %1187 = vrot.lane.b32.xlu0 %v1180, 64
        %v1188 = vpop.permute.xlu0 %1187
        %1189 = vrot.lane.b32.xlu0 %v1181, 64
        %v1190 = vpop.permute.xlu0 %1189
        %v1191 = vsel %vm525, %v1186, %v1188
        %v1192 = vsel %vm525, %v1188, %v1190
        %v1196 = vadd.f32 %v1166, %v1191
        %v1197 = vadd.f32 %v1167, %v1192
        %v1198 = vadd.f32 %v1168, %v1190
        %s1199 = sld [smem:[#allocation4 + $0x26]]
        %v1200 = vstv %s1199
        %v1201 = vmul.f32 %v1200, %v391
        %v1202 = vmul.f32 %v1200, %v387
        %v1203 = vmul.f32 %v1200, %v392
        %s1204 = sld [smem:[#allocation4 + $0x57]]
        %v1205 = vstv %s1204
        %v1206 = vmul.f32 %v1205, %v403
        %v1207 = vmul.f32 %v1205, %v399
        %v1208 = vmul.f32 %v1205, %v404
        %v1209 = vadd.f32 %v1201, %v1206
        %v1210 = vadd.f32 %v1202, %v1207
        %v1211 = vadd.f32 %v1203, %v1208
        %1215 = vrot.lane.b32.xlu0 %v1209, 48
        %v1216 = vpop.permute.xlu0 %1215
        %1217 = vrot.lane.b32.xlu0 %v1210, 48
        %v1218 = vpop.permute.xlu0 %1217
        %1219 = vrot.lane.b32.xlu0 %v1211, 48
        %v1220 = vpop.permute.xlu0 %1219
        %v1221 = vsel %vm554, %v1216, %v1218
        %v1222 = vsel %vm554, %v1218, %v1220
        %v1226 = vadd.f32 %v1196, %v1221
        %v1227 = vadd.f32 %v1197, %v1222
        %v1228 = vadd.f32 %v1198, %v1220
        %s1229 = sld [smem:[#allocation4 + $0x2d]]
        %v1230 = vstv %s1229
        %v1231 = vmul.f32 %v1230, %v391
        %v1232 = vmul.f32 %v1230, %v387
        %v1233 = vmul.f32 %v1230, %v392
        %s1234 = sld [smem:[#allocation4 + $0x5e]]
        %v1235 = vstv %s1234
        %v1236 = vmul.f32 %v1235, %v403
        %v1237 = vmul.f32 %v1235, %v399
        %v1238 = vmul.f32 %v1235, %v404
        %v1239 = vadd.f32 %v1231, %v1236
        %v1240 = vadd.f32 %v1232, %v1237
        %v1241 = vadd.f32 %v1233, %v1238
        %1245 = vrot.lane.b32.xlu0 %v1239, 32
        %v1246 = vpop.permute.xlu0 %1245
        %1247 = vrot.lane.b32.xlu0 %v1240, 32
        %v1248 = vpop.permute.xlu0 %1247
        %1249 = vrot.lane.b32.xlu0 %v1241, 32
        %v1250 = vpop.permute.xlu0 %1249
        %v1251 = vsel %vm583, %v1246, %v1248
        %v1252 = vsel %vm583, %v1248, %v1250
        %v1256 = vadd.f32 %v1226, %v1251
        %v1257 = vadd.f32 %v1227, %v1252
        %v1258 = vadd.f32 %v1228, %v1250
        %v1262 = vcombine.low %v1256, %v1257
        %v1264 = vunpack.c.l.s4 1966171168
        %v1265 = vunpack.c.0.s8 %v1264
        %v1266 = vlaneseq
        %v1267 = vshrl.u32 %v1266, 7
        %v1268 = vsub.s32 %v1265, %v1267
        %v1269 = vrot.slane %v1262, %v1268
        %v1271 = vunpack.c.l.s4 1966171168
        %v1272 = vunpack.c.0.s8 %v1271
        %v1273 = vlaneseq
        %v1274 = vshrl.u32 %v1273, 7
        %v1275 = vsub.s32 %v1272, %v1274
        %v1276 = vrot.slane %v1258, %v1275
        %v1277 = vcombine.low %v1269, %v1276
        %v1279 = vunpack.c.l.s4 1966171168
        %v1280 = vunpack.c.0.s8 %v1279
        %v1281 = vlaneseq
        %v1282 = vshrl.u32 %v1281, 7
        %v1283 = vsub.s32 %v1280, %v1282
        %v1284 = vrot.slane %v1277, %v1283
        %1285 = vrot.lane.b32.xlu0 %v1284, 125
        %v1286 = vpop.permute.xlu0 %1285
        %v1287 = vrot.slane %v1286, 1
        %vm1288 = vcmask 1022976
        %v1289 = vsel %vm1288, %v1286, %v1287
        %v1291 = vadd.f32 %v1065, %v1289
        %vm1292 = vcmp.lt.s32.totalorder %v256, 15
        %s1293 = sld [smem:[#allocation4 + $0x4]]
        %v1294 = vstv %s1293
        %v1295 = vmul.f32 %v1294, %v391
        %v1296 = vmul.f32 %v1294, %v387
        %v1297 = vmul.f32 %v1294, %v392
        %s1298 = sld [smem:[#allocation4 + $0x35]]
        %v1299 = vstv %s1298
        %v1300 = vmul.f32 %v1299, %v403
        %v1301 = vmul.f32 %v1299, %v399
        %v1302 = vmul.f32 %v1299, %v404
        %v1303 = vadd.f32 %v1295, %v1300
        %v1304 = vadd.f32 %v1296, %v1301
        %v1305 = vadd.f32 %v1297, %v1302
        %s1306 = sld [smem:[#allocation4 + $0xb]]
        %v1307 = vstv %s1306
        %v1308 = vmul.f32 %v1307, %v391
        %v1309 = vmul.f32 %v1307, %v387
        %v1310 = vmul.f32 %v1307, %v392
        %s1311 = sld [smem:[#allocation4 + $0x3c]]
        %v1312 = vstv %s1311
        %v1313 = vmul.f32 %v1312, %v403
        %v1314 = vmul.f32 %v1312, %v399
        %v1315 = vmul.f32 %v1312, %v404
        %v1316 = vadd.f32 %v1308, %v1313
        %v1317 = vadd.f32 %v1309, %v1314
        %v1318 = vadd.f32 %v1310, %v1315
        %1322 = vrot.lane.b32.xlu0 %v1316, 112
        %v1323 = vpop.permute.xlu0 %1322
        %1324 = vrot.lane.b32.xlu0 %v1317, 112
        %v1325 = vpop.permute.xlu0 %1324
        %1326 = vrot.lane.b32.xlu0 %v1318, 112
        %v1327 = vpop.permute.xlu0 %1326
        %v1328 = vsel %vm438, %v1323, %v1325
        %v1329 = vsel %vm438, %v1325, %v1327
        %v1333 = vadd.f32 %v1303, %v1328
        %v1334 = vadd.f32 %v1304, %v1329
        %v1335 = vadd.f32 %v1305, %v1327
        %s1336 = sld [smem:[#allocation4 + $0x12]]
        %v1337 = vstv %s1336
        %v1338 = vmul.f32 %v1337, %v391
        %v1339 = vmul.f32 %v1337, %v387
        %v1340 = vmul.f32 %v1337, %v392
        %s1341 = sld [smem:[#allocation4 + $0x43]]
        %v1342 = vstv %s1341
        %v1343 = vmul.f32 %v1342, %v403
        %v1344 = vmul.f32 %v1342, %v399
        %v1345 = vmul.f32 %v1342, %v404
        %v1346 = vadd.f32 %v1338, %v1343
        %v1347 = vadd.f32 %v1339, %v1344
        %v1348 = vadd.f32 %v1340, %v1345
        %1352 = vrot.lane.b32.xlu0 %v1346, 96
        %v1353 = vpop.permute.xlu0 %1352
        %1354 = vrot.lane.b32.xlu0 %v1347, 96
        %v1355 = vpop.permute.xlu0 %1354
        %1356 = vrot.lane.b32.xlu0 %v1348, 96
        %v1357 = vpop.permute.xlu0 %1356
        %v1358 = vsel %vm467, %v1353, %v1355
        %v1359 = vsel %vm467, %v1355, %v1357
        %v1363 = vadd.f32 %v1333, %v1358
        %v1364 = vadd.f32 %v1334, %v1359
        %v1365 = vadd.f32 %v1335, %v1357
        %s1366 = sld [smem:[#allocation4 + $0x19]]
        %v1367 = vstv %s1366
        %v1368 = vmul.f32 %v1367, %v391
        %v1369 = vmul.f32 %v1367, %v387
        %v1370 = vmul.f32 %v1367, %v392
        %s1371 = sld [smem:[#allocation4 + $0x4a]]
        %v1372 = vstv %s1371
        %v1373 = vmul.f32 %v1372, %v403
        %v1374 = vmul.f32 %v1372, %v399
        %v1375 = vmul.f32 %v1372, %v404
        %v1376 = vadd.f32 %v1368, %v1373
        %v1377 = vadd.f32 %v1369, %v1374
        %v1378 = vadd.f32 %v1370, %v1375
        %1382 = vrot.lane.b32.xlu0 %v1376, 80
        %v1383 = vpop.permute.xlu0 %1382
        %1384 = vrot.lane.b32.xlu0 %v1377, 80
        %v1385 = vpop.permute.xlu0 %1384
        %1386 = vrot.lane.b32.xlu0 %v1378, 80
        %v1387 = vpop.permute.xlu0 %1386
        %v1388 = vsel %vm496, %v1383, %v1385
        %v1389 = vsel %vm496, %v1385, %v1387
        %v1393 = vadd.f32 %v1363, %v1388
        %v1394 = vadd.f32 %v1364, %v1389
        %v1395 = vadd.f32 %v1365, %v1387
        %s1396 = sld [smem:[#allocation4 + $0x20]]
        %v1397 = vstv %s1396
        %v1398 = vmul.f32 %v1397, %v391
        %v1399 = vmul.f32 %v1397, %v387
        %v1400 = vmul.f32 %v1397, %v392
        %s1401 = sld [smem:[#allocation4 + $0x51]]
        %v1402 = vstv %s1401
        %v1403 = vmul.f32 %v1402, %v403
        %v1404 = vmul.f32 %v1402, %v399
        %v1405 = vmul.f32 %v1402, %v404
        %v1406 = vadd.f32 %v1398, %v1403
        %v1407 = vadd.f32 %v1399, %v1404
        %v1408 = vadd.f32 %v1400, %v1405
        %1412 = vrot.lane.b32.xlu0 %v1406, 64
        %v1413 = vpop.permute.xlu0 %1412
        %1414 = vrot.lane.b32.xlu0 %v1407, 64
        %v1415 = vpop.permute.xlu0 %1414
        %1416 = vrot.lane.b32.xlu0 %v1408, 64
        %v1417 = vpop.permute.xlu0 %1416
        %v1418 = vsel %vm525, %v1413, %v1415
        %v1419 = vsel %vm525, %v1415, %v1417
        %v1423 = vadd.f32 %v1393, %v1418
        %v1424 = vadd.f32 %v1394, %v1419
        %v1425 = vadd.f32 %v1395, %v1417
        %s1426 = sld [smem:[#allocation4 + $0x27]]
        %v1427 = vstv %s1426
        %v1428 = vmul.f32 %v1427, %v391
        %v1429 = vmul.f32 %v1427, %v387
        %v1430 = vmul.f32 %v1427, %v392
        %s1431 = sld [smem:[#allocation4 + $0x58]]
        %v1432 = vstv %s1431
        %v1433 = vmul.f32 %v1432, %v403
        %v1434 = vmul.f32 %v1432, %v399
        %v1435 = vmul.f32 %v1432, %v404
        %v1436 = vadd.f32 %v1428, %v1433
        %v1437 = vadd.f32 %v1429, %v1434
        %v1438 = vadd.f32 %v1430, %v1435
        %1442 = vrot.lane.b32.xlu0 %v1436, 48
        %v1443 = vpop.permute.xlu0 %1442
        %1444 = vrot.lane.b32.xlu0 %v1437, 48
        %v1445 = vpop.permute.xlu0 %1444
        %1446 = vrot.lane.b32.xlu0 %v1438, 48
        %v1447 = vpop.permute.xlu0 %1446
        %v1448 = vsel %vm554, %v1443, %v1445
        %v1449 = vsel %vm554, %v1445, %v1447
        %v1453 = vadd.f32 %v1423, %v1448
        %v1454 = vadd.f32 %v1424, %v1449
        %v1455 = vadd.f32 %v1425, %v1447
        %s1456 = sld [smem:[#allocation4 + $0x2e]]
        %v1457 = vstv %s1456
        %v1458 = vmul.f32 %v1457, %v391
        %v1459 = vmul.f32 %v1457, %v387
        %v1460 = vmul.f32 %v1457, %v392
        %s1461 = sld [smem:[#allocation4 + $0x5f]]
        %v1462 = vstv %s1461
        %v1463 = vmul.f32 %v1462, %v403
        %v1464 = vmul.f32 %v1462, %v399
        %v1465 = vmul.f32 %v1462, %v404
        %v1466 = vadd.f32 %v1458, %v1463
        %v1467 = vadd.f32 %v1459, %v1464
        %v1468 = vadd.f32 %v1460, %v1465
        %1472 = vrot.lane.b32.xlu0 %v1466, 32
        %v1473 = vpop.permute.xlu0 %1472
        %1474 = vrot.lane.b32.xlu0 %v1467, 32
        %v1475 = vpop.permute.xlu0 %1474
        %1476 = vrot.lane.b32.xlu0 %v1468, 32
        %v1477 = vpop.permute.xlu0 %1476
        %v1478 = vsel %vm583, %v1473, %v1475
        %v1479 = vsel %vm583, %v1475, %v1477
        %v1483 = vadd.f32 %v1453, %v1478
        %v1484 = vadd.f32 %v1454, %v1479
        %v1485 = vadd.f32 %v1455, %v1477
        %v1489 = vcombine.low %v1483, %v1484
        %v1491 = vunpack.c.l.s4 1966171168
        %v1492 = vunpack.c.0.s8 %v1491
        %v1493 = vlaneseq
        %v1494 = vshrl.u32 %v1493, 7
        %v1495 = vsub.s32 %v1492, %v1494
        %v1496 = vrot.slane %v1489, %v1495
        %v1498 = vunpack.c.l.s4 1966171168
        %v1499 = vunpack.c.0.s8 %v1498
        %v1500 = vlaneseq
        %v1501 = vshrl.u32 %v1500, 7
        %v1502 = vsub.s32 %v1499, %v1501
        %v1503 = vrot.slane %v1485, %v1502
        %v1504 = vcombine.low %v1496, %v1503
        %v1506 = vunpack.c.l.s4 1966171168
        %v1507 = vunpack.c.0.s8 %v1506
        %v1508 = vlaneseq
        %v1509 = vshrl.u32 %v1508, 7
        %v1510 = vsub.s32 %v1507, %v1509
        %v1511 = vrot.slane %v1504, %v1510
        %1512 = vrot.lane.b32.xlu0 %v1511, 124
        %v1513 = vpop.permute.xlu0 %1512
        %v1514 = vrot.slane %v1513, 1
        %vm1515 = vcmask 1014784
        %v1516 = vsel %vm1515, %v1513, %v1514
        %v1518 = vsel %vm1292, %v1516, 0.0
        %v1519 = vadd.f32 %v1291, %v1518
        %vm1520 = vcmp.lt.s32.totalorder %v256, 14
        %s1521 = sld [smem:[#allocation4 + $0x5]]
        %v1522 = vstv %s1521
        %v1523 = vmul.f32 %v1522, %v391
        %v1524 = vmul.f32 %v1522, %v387
        %v1525 = vmul.f32 %v1522, %v392
        %s1526 = sld [smem:[#allocation4 + $0x36]]
        %v1527 = vstv %s1526
        %v1528 = vmul.f32 %v1527, %v403
        %v1529 = vmul.f32 %v1527, %v399
        %v1530 = vmul.f32 %v1527, %v404
        %v1531 = vadd.f32 %v1523, %v1528
        %v1532 = vadd.f32 %v1524, %v1529
        %v1533 = vadd.f32 %v1525, %v1530
        %s1534 = sld [smem:[#allocation4 + $0xc]]
        %v1535 = vstv %s1534
        %v1536 = vmul.f32 %v1535, %v391
        %v1537 = vmul.f32 %v1535, %v387
        %v1538 = vmul.f32 %v1535, %v392
        %s1539 = sld [smem:[#allocation4 + $0x3d]]
        %v1540 = vstv %s1539
        %v1541 = vmul.f32 %v1540, %v403
        %v1542 = vmul.f32 %v1540, %v399
        %v1543 = vmul.f32 %v1540, %v404
        %v1544 = vadd.f32 %v1536, %v1541
        %v1545 = vadd.f32 %v1537, %v1542
        %v1546 = vadd.f32 %v1538, %v1543
        %1550 = vrot.lane.b32.xlu0 %v1544, 112
        %v1551 = vpop.permute.xlu0 %1550
        %1552 = vrot.lane.b32.xlu0 %v1545, 112
        %v1553 = vpop.permute.xlu0 %1552
        %1554 = vrot.lane.b32.xlu0 %v1546, 112
        %v1555 = vpop.permute.xlu0 %1554
        %v1556 = vsel %vm438, %v1551, %v1553
        %v1557 = vsel %vm438, %v1553, %v1555
        %v1561 = vadd.f32 %v1531, %v1556
        %v1562 = vadd.f32 %v1532, %v1557
        %v1563 = vadd.f32 %v1533, %v1555
        %s1564 = sld [smem:[#allocation4 + $0x13]]
        %v1565 = vstv %s1564
        %v1566 = vmul.f32 %v1565, %v391
        %v1567 = vmul.f32 %v1565, %v387
        %v1568 = vmul.f32 %v1565, %v392
        %s1569 = sld [smem:[#allocation4 + $0x44]]
        %v1570 = vstv %s1569
        %v1571 = vmul.f32 %v1570, %v403
        %v1572 = vmul.f32 %v1570, %v399
        %v1573 = vmul.f32 %v1570, %v404
        %v1574 = vadd.f32 %v1566, %v1571
        %v1575 = vadd.f32 %v1567, %v1572
        %v1576 = vadd.f32 %v1568, %v1573
        %1580 = vrot.lane.b32.xlu0 %v1574, 96
        %v1581 = vpop.permute.xlu0 %1580
        %1582 = vrot.lane.b32.xlu0 %v1575, 96
        %v1583 = vpop.permute.xlu0 %1582
        %1584 = vrot.lane.b32.xlu0 %v1576, 96
        %v1585 = vpop.permute.xlu0 %1584
        %v1586 = vsel %vm467, %v1581, %v1583
        %v1587 = vsel %vm467, %v1583, %v1585
        %v1591 = vadd.f32 %v1561, %v1586
        %v1592 = vadd.f32 %v1562, %v1587
        %v1593 = vadd.f32 %v1563, %v1585
        %s1594 = sld [smem:[#allocation4 + $0x1a]]
        %v1595 = vstv %s1594
        %v1596 = vmul.f32 %v1595, %v391
        %v1597 = vmul.f32 %v1595, %v387
        %v1598 = vmul.f32 %v1595, %v392
        %s1599 = sld [smem:[#allocation4 + $0x4b]]
        %v1600 = vstv %s1599
        %v1601 = vmul.f32 %v1600, %v403
        %v1602 = vmul.f32 %v1600, %v399
        %v1603 = vmul.f32 %v1600, %v404
        %v1604 = vadd.f32 %v1596, %v1601
        %v1605 = vadd.f32 %v1597, %v1602
        %v1606 = vadd.f32 %v1598, %v1603
        %1610 = vrot.lane.b32.xlu0 %v1604, 80
        %v1611 = vpop.permute.xlu0 %1610
        %1612 = vrot.lane.b32.xlu0 %v1605, 80
        %v1613 = vpop.permute.xlu0 %1612
        %1614 = vrot.lane.b32.xlu0 %v1606, 80
        %v1615 = vpop.permute.xlu0 %1614
        %v1616 = vsel %vm496, %v1611, %v1613
        %v1617 = vsel %vm496, %v1613, %v1615
        %v1621 = vadd.f32 %v1591, %v1616
        %v1622 = vadd.f32 %v1592, %v1617
        %v1623 = vadd.f32 %v1593, %v1615
        %s1624 = sld [smem:[#allocation4 + $0x21]]
        %v1625 = vstv %s1624
        %v1626 = vmul.f32 %v1625, %v391
        %v1627 = vmul.f32 %v1625, %v387
        %v1628 = vmul.f32 %v1625, %v392
        %s1629 = sld [smem:[#allocation4 + $0x52]]
        %v1630 = vstv %s1629
        %v1631 = vmul.f32 %v1630, %v403
        %v1632 = vmul.f32 %v1630, %v399
        %v1633 = vmul.f32 %v1630, %v404
        %v1634 = vadd.f32 %v1626, %v1631
        %v1635 = vadd.f32 %v1627, %v1632
        %v1636 = vadd.f32 %v1628, %v1633
        %1640 = vrot.lane.b32.xlu0 %v1634, 64
        %v1641 = vpop.permute.xlu0 %1640
        %1642 = vrot.lane.b32.xlu0 %v1635, 64
        %v1643 = vpop.permute.xlu0 %1642
        %1644 = vrot.lane.b32.xlu0 %v1636, 64
        %v1645 = vpop.permute.xlu0 %1644
        %v1646 = vsel %vm525, %v1641, %v1643
        %v1647 = vsel %vm525, %v1643, %v1645
        %v1651 = vadd.f32 %v1621, %v1646
        %v1652 = vadd.f32 %v1622, %v1647
        %v1653 = vadd.f32 %v1623, %v1645
        %s1654 = sld [smem:[#allocation4 + $0x28]]
        %v1655 = vstv %s1654
        %v1656 = vmul.f32 %v1655, %v391
        %v1657 = vmul.f32 %v1655, %v387
        %v1658 = vmul.f32 %v1655, %v392
        %s1659 = sld [smem:[#allocation4 + $0x59]]
        %v1660 = vstv %s1659
        %v1661 = vmul.f32 %v1660, %v403
        %v1662 = vmul.f32 %v1660, %v399
        %v1663 = vmul.f32 %v1660, %v404
        %v1664 = vadd.f32 %v1656, %v1661
        %v1665 = vadd.f32 %v1657, %v1662
        %v1666 = vadd.f32 %v1658, %v1663
        %1670 = vrot.lane.b32.xlu0 %v1664, 48
        %v1671 = vpop.permute.xlu0 %1670
        %1672 = vrot.lane.b32.xlu0 %v1665, 48
        %v1673 = vpop.permute.xlu0 %1672
        %1674 = vrot.lane.b32.xlu0 %v1666, 48
        %v1675 = vpop.permute.xlu0 %1674
        %v1676 = vsel %vm554, %v1671, %v1673
        %v1677 = vsel %vm554, %v1673, %v1675
        %v1681 = vadd.f32 %v1651, %v1676
        %v1682 = vadd.f32 %v1652, %v1677
        %v1683 = vadd.f32 %v1653, %v1675
        %s1684 = sld [smem:[#allocation4 + $0x2f]]
        %v1685 = vstv %s1684
        %v1686 = vmul.f32 %v1685, %v391
        %v1687 = vmul.f32 %v1685, %v387
        %v1688 = vmul.f32 %v1685, %v392
        %s1689 = sld [smem:[#allocation4 + $0x60]]
        %v1690 = vstv %s1689
        %v1691 = vmul.f32 %v1690, %v403
        %v1692 = vmul.f32 %v1690, %v399
        %v1693 = vmul.f32 %v1690, %v404
        %v1694 = vadd.f32 %v1686, %v1691
        %v1695 = vadd.f32 %v1687, %v1692
        %v1696 = vadd.f32 %v1688, %v1693
        %1700 = vrot.lane.b32.xlu0 %v1694, 32
        %v1701 = vpop.permute.xlu0 %1700
        %1702 = vrot.lane.b32.xlu0 %v1695, 32
        %v1703 = vpop.permute.xlu0 %1702
        %1704 = vrot.lane.b32.xlu0 %v1696, 32
        %v1705 = vpop.permute.xlu0 %1704
        %v1706 = vsel %vm583, %v1701, %v1703
        %v1707 = vsel %vm583, %v1703, %v1705
        %v1711 = vadd.f32 %v1681, %v1706
        %v1712 = vadd.f32 %v1682, %v1707
        %v1713 = vadd.f32 %v1683, %v1705
        %v1717 = vcombine.low %v1711, %v1712
        %v1719 = vunpack.c.l.s4 1966171168
        %v1720 = vunpack.c.0.s8 %v1719
        %v1721 = vlaneseq
        %v1722 = vshrl.u32 %v1721, 7
        %v1723 = vsub.s32 %v1720, %v1722
        %v1724 = vrot.slane %v1717, %v1723
        %v1726 = vunpack.c.l.s4 1966171168
        %v1727 = vunpack.c.0.s8 %v1726
        %v1728 = vlaneseq
        %v1729 = vshrl.u32 %v1728, 7
        %v1730 = vsub.s32 %v1727, %v1729
        %v1731 = vrot.slane %v1713, %v1730
        %v1732 = vcombine.low %v1724, %v1731
        %v1734 = vunpack.c.l.s4 1966171168
        %v1735 = vunpack.c.0.s8 %v1734
        %v1736 = vlaneseq
        %v1737 = vshrl.u32 %v1736, 7
        %v1738 = vsub.s32 %v1735, %v1737
        %v1739 = vrot.slane %v1732, %v1738
        %1740 = vrot.lane.b32.xlu0 %v1739, 123
        %v1741 = vpop.permute.xlu0 %1740
        %v1742 = vrot.slane %v1741, 1
        %vm1743 = vcmask 1006592
        %v1744 = vsel %vm1743, %v1741, %v1742
        %v1746 = vsel %vm1520, %v1744, 0.0
        %v1747 = vadd.f32 %v1519, %v1746
        %vm1748 = vcmp.lt.s32.totalorder %v256, 13
        %s1749 = sld [smem:[#allocation4 + $0x6]]
        %v1750 = vstv %s1749
        %v1751 = vmul.f32 %v1750, %v391
        %v1752 = vmul.f32 %v1750, %v387
        %v1753 = vmul.f32 %v1750, %v392
        %s1754 = sld [smem:[#allocation4 + $0x37]]
        %v1755 = vstv %s1754
        %v1756 = vmul.f32 %v1755, %v403
        %v1757 = vmul.f32 %v1755, %v399
        %v1758 = vmul.f32 %v1755, %v404
        %v1759 = vadd.f32 %v1751, %v1756
        %v1760 = vadd.f32 %v1752, %v1757
        %v1761 = vadd.f32 %v1753, %v1758
        %s1762 = sld [smem:[#allocation4 + $0xd]]
        %v1763 = vstv %s1762
        %v1764 = vmul.f32 %v1763, %v391
        %v1765 = vmul.f32 %v1763, %v387
        %v1766 = vmul.f32 %v1763, %v392
        %s1767 = sld [smem:[#allocation4 + $0x3e]]
        %v1768 = vstv %s1767
        %v1769 = vmul.f32 %v1768, %v403
        %v1770 = vmul.f32 %v1768, %v399
        %v1771 = vmul.f32 %v1768, %v404
        %v1772 = vadd.f32 %v1764, %v1769
        %v1773 = vadd.f32 %v1765, %v1770
        %v1774 = vadd.f32 %v1766, %v1771
        %1778 = vrot.lane.b32.xlu0 %v1772, 112
        %v1779 = vpop.permute.xlu0 %1778
        %1780 = vrot.lane.b32.xlu0 %v1773, 112
        %v1781 = vpop.permute.xlu0 %1780
        %1782 = vrot.lane.b32.xlu0 %v1774, 112
        %v1783 = vpop.permute.xlu0 %1782
        %v1784 = vsel %vm438, %v1779, %v1781
        %v1785 = vsel %vm438, %v1781, %v1783
        %v1789 = vadd.f32 %v1759, %v1784
        %v1790 = vadd.f32 %v1760, %v1785
        %v1791 = vadd.f32 %v1761, %v1783
        %s1792 = sld [smem:[#allocation4 + $0x14]]
        %v1793 = vstv %s1792
        %v1794 = vmul.f32 %v1793, %v391
        %v1795 = vmul.f32 %v1793, %v387
        %v1796 = vmul.f32 %v1793, %v392
        %s1797 = sld [smem:[#allocation4 + $0x45]]
        %v1798 = vstv %s1797
        %v1799 = vmul.f32 %v1798, %v403
        %v1800 = vmul.f32 %v1798, %v399
        %v1801 = vmul.f32 %v1798, %v404
        %v1802 = vadd.f32 %v1794, %v1799
        %v1803 = vadd.f32 %v1795, %v1800
        %v1804 = vadd.f32 %v1796, %v1801
        %1808 = vrot.lane.b32.xlu0 %v1802, 96
        %v1809 = vpop.permute.xlu0 %1808
        %1810 = vrot.lane.b32.xlu0 %v1803, 96
        %v1811 = vpop.permute.xlu0 %1810
        %1812 = vrot.lane.b32.xlu0 %v1804, 96
        %v1813 = vpop.permute.xlu0 %1812
        %v1814 = vsel %vm467, %v1809, %v1811
        %v1815 = vsel %vm467, %v1811, %v1813
        %v1819 = vadd.f32 %v1789, %v1814
        %v1820 = vadd.f32 %v1790, %v1815
        %v1821 = vadd.f32 %v1791, %v1813
        %s1822 = sld [smem:[#allocation4 + $0x1b]]
        %v1823 = vstv %s1822
        %v1824 = vmul.f32 %v1823, %v391
        %v1825 = vmul.f32 %v1823, %v387
        %v1826 = vmul.f32 %v1823, %v392
        %s1827 = sld [smem:[#allocation4 + $0x4c]]
        %v1828 = vstv %s1827
        %v1829 = vmul.f32 %v1828, %v403
        %v1830 = vmul.f32 %v1828, %v399
        %v1831 = vmul.f32 %v1828, %v404
        %v1832 = vadd.f32 %v1824, %v1829
        %v1833 = vadd.f32 %v1825, %v1830
        %v1834 = vadd.f32 %v1826, %v1831
        %1838 = vrot.lane.b32.xlu0 %v1832, 80
        %v1839 = vpop.permute.xlu0 %1838
        %1840 = vrot.lane.b32.xlu0 %v1833, 80
        %v1841 = vpop.permute.xlu0 %1840
        %1842 = vrot.lane.b32.xlu0 %v1834, 80
        %v1843 = vpop.permute.xlu0 %1842
        %v1844 = vsel %vm496, %v1839, %v1841
        %v1845 = vsel %vm496, %v1841, %v1843
        %v1849 = vadd.f32 %v1819, %v1844
        %v1850 = vadd.f32 %v1820, %v1845
        %v1851 = vadd.f32 %v1821, %v1843
        %s1852 = sld [smem:[#allocation4 + $0x22]]
        %v1853 = vstv %s1852
        %v1854 = vmul.f32 %v1853, %v391
        %v1855 = vmul.f32 %v1853, %v387
        %v1856 = vmul.f32 %v1853, %v392
        %s1857 = sld [smem:[#allocation4 + $0x53]]
        %v1858 = vstv %s1857
        %v1859 = vmul.f32 %v1858, %v403
        %v1860 = vmul.f32 %v1858, %v399
        %v1861 = vmul.f32 %v1858, %v404
        %v1862 = vadd.f32 %v1854, %v1859
        %v1863 = vadd.f32 %v1855, %v1860
        %v1864 = vadd.f32 %v1856, %v1861
        %1868 = vrot.lane.b32.xlu0 %v1862, 64
        %v1869 = vpop.permute.xlu0 %1868
        %1870 = vrot.lane.b32.xlu0 %v1863, 64
        %v1871 = vpop.permute.xlu0 %1870
        %1872 = vrot.lane.b32.xlu0 %v1864, 64
        %v1873 = vpop.permute.xlu0 %1872
        %v1874 = vsel %vm525, %v1869, %v1871
        %v1875 = vsel %vm525, %v1871, %v1873
        %v1879 = vadd.f32 %v1849, %v1874
        %v1880 = vadd.f32 %v1850, %v1875
        %v1881 = vadd.f32 %v1851, %v1873
        %s1882 = sld [smem:[#allocation4 + $0x29]]
        %v1883 = vstv %s1882
        %v1884 = vmul.f32 %v1883, %v391
        %v1885 = vmul.f32 %v1883, %v387
        %v1886 = vmul.f32 %v1883, %v392
        %s1887 = sld [smem:[#allocation4 + $0x5a]]
        %v1888 = vstv %s1887
        %v1889 = vmul.f32 %v1888, %v403
        %v1890 = vmul.f32 %v1888, %v399
        %v1891 = vmul.f32 %v1888, %v404
        %v1892 = vadd.f32 %v1884, %v1889
        %v1893 = vadd.f32 %v1885, %v1890
        %v1894 = vadd.f32 %v1886, %v1891
        %1898 = vrot.lane.b32.xlu0 %v1892, 48
        %v1899 = vpop.permute.xlu0 %1898
        %1900 = vrot.lane.b32.xlu0 %v1893, 48
        %v1901 = vpop.permute.xlu0 %1900
        %1902 = vrot.lane.b32.xlu0 %v1894, 48
        %v1903 = vpop.permute.xlu0 %1902
        %v1904 = vsel %vm554, %v1899, %v1901
        %v1905 = vsel %vm554, %v1901, %v1903
        %v1909 = vadd.f32 %v1879, %v1904
        %v1910 = vadd.f32 %v1880, %v1905
        %v1911 = vadd.f32 %v1881, %v1903
        %s1912 = sld [smem:[#allocation4 + $0x30]]
        %v1913 = vstv %s1912
        %v1914 = vmul.f32 %v1913, %v391
        %v1915 = vmul.f32 %v1913, %v387
        %v1916 = vmul.f32 %v1913, %v392
        %s1917 = sld [smem:[#allocation4 + $0x61]]
        %v1918 = vstv %s1917
        %v1919 = vmul.f32 %v1918, %v403
        %v1920 = vmul.f32 %v1918, %v399
        %v1921 = vmul.f32 %v1918, %v404
        %v1922 = vadd.f32 %v1914, %v1919
        %v1923 = vadd.f32 %v1915, %v1920
        %v1924 = vadd.f32 %v1916, %v1921
        %1928 = vrot.lane.b32.xlu0 %v1922, 32
        %v1929 = vpop.permute.xlu0 %1928
        %1930 = vrot.lane.b32.xlu0 %v1923, 32
        %v1931 = vpop.permute.xlu0 %1930
        %1932 = vrot.lane.b32.xlu0 %v1924, 32
        %v1933 = vpop.permute.xlu0 %1932
        %v1934 = vsel %vm583, %v1929, %v1931
        %v1935 = vsel %vm583, %v1931, %v1933
        %v1939 = vadd.f32 %v1909, %v1934
        %v1940 = vadd.f32 %v1910, %v1935
        %v1941 = vadd.f32 %v1911, %v1933
        %v1945 = vcombine.low %v1939, %v1940
        %v1947 = vunpack.c.l.s4 1966171168
        %v1948 = vunpack.c.0.s8 %v1947
        %v1949 = vlaneseq
        %v1950 = vshrl.u32 %v1949, 7
        %v1951 = vsub.s32 %v1948, %v1950
        %v1952 = vrot.slane %v1945, %v1951
        %v1954 = vunpack.c.l.s4 1966171168
        %v1955 = vunpack.c.0.s8 %v1954
        %v1956 = vlaneseq
        %v1957 = vshrl.u32 %v1956, 7
        %v1958 = vsub.s32 %v1955, %v1957
        %v1959 = vrot.slane %v1941, %v1958
        %v1960 = vcombine.low %v1952, %v1959
        %v1962 = vunpack.c.l.s4 1966171168
        %v1963 = vunpack.c.0.s8 %v1962
        %v1964 = vlaneseq
        %v1965 = vshrl.u32 %v1964, 7
        %v1966 = vsub.s32 %v1963, %v1965
        %v1967 = vrot.slane %v1960, %v1966
        %1968 = vrot.lane.b32.xlu0 %v1967, 122
        %v1969 = vpop.permute.xlu0 %1968
        %v1970 = vrot.slane %v1969, 1
        %vm1971 = vcmask 998400
        %v1972 = vsel %vm1971, %v1969, %v1970
        %v1974 = vsel %vm1748, %v1972, 0.0
        %v1975 = vadd.f32 %v1747, %v1974
        %v1976 = vxor.u32 %v1975, 2147483648
        %v1977 = vmul.f32 %v1976, 1.442695
        %v1978 = vpow.pop %v1977
        %v1979 = vadd.f32 %v1978, 1.0
        %v1980 = vrcp.pop %v1979
        %v1981 = vmul.f32 1.0, %v1980
        %v1983 = vlaneseq
        %v1984 = vshrl.u32 %v1983, 7
        %v1985 = vsub.s32 0, %v1984
        %v1986 = vrot.slane %v1981, %v1985
        %v1987 = vlaneseq
        %v1988 = vshrl.u32 %v1987, 7
        %v1989 = vsub.s32 1, %v1988
        %v1990 = vrot.slane %v1981, %v1989
        %v1993 = vmul.f32 %v346, %v1986
        %v1994 = vmul.f32 %v347, %v1990
        %v1995 = vmul.f32 %v348, %v1986
        %v1996 = vmul.f32 %v349, %v1990
        %1997 = vst [vmem:[%s251] sm:$0xff] %v1993
        %1998 = vst [vmem:[%s251 + $0x8] sm:$0xff] %v1994
        %1999 = vst [vmem:[%s251 + $0x10] sm:$0xff] %v1995
        %2000 = vst [vmem:[%s251 + $0x18] sm:$0xff] %v1996
        %p2001 = scmp.lt.s32.totalorder %s18, 1
        %s2002 = scalar_select %p2001, %s18, 1
        %s2003 = smul.addr %s2002, 4
        %s2004 = smul.addr %s2003, 8
        %s2005 = scalar_lea.vmem %s5, %s2004
        // Predicated region
        $region49: #{cbam_block_conv.1} parent=39 // pred_check
          %p2006 = pneg %p146
        $region50: #{cbam_block_conv.1} parent=39 // pred_check_branch
          %2008 = sbr.rel (%p2006) target = $region52
        $region51: #{cbam_block_conv.1} parent=39 // pred_region
          _
        $region52: #{cbam_block_conv.1} parent=39 // pred_fallthru
          _
      $region40: #{cbam_block_conv.1} parent=5 // pred_fallthru
        _
      %p2009 = scmp.le.s32.totalorder 2, %s13
      // Predicated region
      $region53: #{cbam_block_conv.1} parent=5 // pred_check
        %p2010 = pneg %p2009
      $region54: #{cbam_block_conv.1} parent=5 // pred_check_branch
        %2012 = sbr.rel (%p2010) target = $region56
      $region55: #{cbam_block_conv.1} parent=5 // pred_region
        %s2013 = ssub.s32 %s13, 2
        // Predicated region
        $region57: #{cbam_block_conv.1} parent=55 // pred_check
          %p2014 = pneg %p152
        $region58: #{cbam_block_conv.1} parent=55 // pred_check_branch
          %2016 = sbr.rel (%p2014) target = $region60
        $region59: #{cbam_block_conv.1} parent=55 // pred_region
          %p2017 = scmp.lt.s32.totalorder %s19, 1
          %s2018 = scalar_select %p2017, %s19, 1
          %s2019 = smul.addr %s2018, 4
          %s2020 = smul.addr %s2019, 8
          %s2021 = scalar_lea.vmem %s5, %s2020
        $region60: #{cbam_block_conv.1} parent=55 // pred_fallthru
          _
      $region56: #{cbam_block_conv.1} parent=5 // pred_fallthru
        _
    $region6: #{cbam_block_conv.1} parent=1 // loop_footer
      %s17 = sadd.s32 1, %s13
    $region7: #{cbam_block_conv.1} parent=1 // loop_footer_branch
      %12 = sbr.rel target = $region3
    $region8: #{cbam_block_conv.1} parent=1 // loop_exit
      _
    %2022 = vsyncpa [#allocation3], 1
    %s2023 = scalar_lea.sflag [#allocation3], 1
    %2024 = vsyncpa %s2023, 1
    %2025 = vsyncpa [#allocation5], 1

</llo_original>
